<compile_context>
chip_gen: v7x
topology: tpu7x:2x2x1
jax: 0.10.0
libtpu: 0.0.40
codegen_flags: <defaults>
</compile_context>

<pallas_src>
import jax
import jax.numpy as jnp
from jax import lax
from jax.experimental import pallas as pl
from jax.experimental.pallas import tpu as pltpu

EPS = 1e-5

# Operand dtype for the conv matmuls.  f32 keeps numerics essentially identical
# to the XLA reference at this tiny size; flip to jnp.bfloat16 for ~2x MXU rate
# at real sizes (accumulation stays f32; BN / ReLU / residual math stays f32,
# which is also the right split on v5e where the VPU has no bf16 path).
MATMUL_DTYPE = jnp.float32


def _make_resblock_kernel(R, WC):
    """R = N*H rows, WC = C*W lanes (128 when C=8, W=16)."""

    def kernel(x_ref, a_ref, b1_ref, b2_ref, p_ref,
               g1_ref, be1_ref, g2_ref, be2_ref, out_ref):
        x = x_ref[...]          # (R, WC) f32, lane index = c*W + w
        p = p_ref[...]          # (WC, WC) per-channel average+broadcast matrix

        def conv3x3(v, b_ref):
            # sum_kh  (row_shift[kh] @ v) @ band(w[kh])   -- all on the MXU.
            vm = v.astype(MATMUL_DTYPE)
            acc = jnp.zeros((R, WC), jnp.float32)
            for kh in range(3):
                shifted = jnp.dot(a_ref[kh], vm,
                                  preferred_element_type=MATMUL_DTYPE)
                acc = acc + jnp.dot(shifted, b_ref[kh],
                                    preferred_element_type=jnp.float32)
            return acc

        def batchnorm(acc, gamma, beta):
            # Single pass: E[x], E[x^2] per channel; biased variance (train mode).
            s1 = jnp.sum(acc, axis=0, keepdims=True)        # (1, WC)
            s2 = jnp.sum(acc * acc, axis=0, keepdims=True)  # (1, WC)
            mean = jnp.dot(s1, p, preferred_element_type=jnp.float32)
            ex2 = jnp.dot(s2, p, preferred_element_type=jnp.float32)
            var = ex2 - mean * mean
            scale = gamma * lax.rsqrt(var + EPS)            # (1, WC)
            return acc * scale + (beta - mean * scale)

        y1 = jnp.maximum(batchnorm(conv3x3(x, b1_ref),
                                   g1_ref[...], be1_ref[...]), 0.0)
        y2 = batchnorm(conv3x3(y1, b2_ref), g2_ref[...], be2_ref[...]) + x
        out_ref[...] = jnp.maximum(y2, 0.0)

    return kernel


def _banded_weights(w_oihw, W):
    """(Cout, Cin, 3, 3) -> (3, Cin*W, Cout*W) block-banded matrices.

    B[kh][ci*W + wi, co*W + wo] = w[co, ci, kh, wi - wo + 1] (0 off the band),
    which folds the kw taps and the width zero-padding into a single matmul.
    """
    wt = jnp.transpose(w_oihw, (2, 3, 1, 0)).astype(jnp.float32)  # (kh,kw,ci,co)
    bands = []
    for kh in range(3):
        b = sum(jnp.kron(wt[kh, kw], jnp.eye(W, k=1 - kw, dtype=jnp.float32))
                for kw in range(3))
        bands.append(b)
    return jnp.stack(bands)


def _shift_matrices(N, H):
    """(3, N*H, N*H) 0/1 matrices: A[kh] @ X selects row (h + kh - 1) of the
    same image (zero when out of range) => kh taps + height zero-padding."""
    r = jnp.arange(N * H)
    same_image = (r[:, None] // H) == (r[None, :] // H)
    mats = [((r[None, :] == r[:, None] + (kh - 1)) & same_image)
            .astype(jnp.float32) for kh in range(3)]
    return jnp.stack(mats)


def resblock_forward(x_nchw, w1_oihw, w2_oihw, g1, b1, g2, b2):
    """PyTorch-convention I/O: x is NCHW, conv weights are OIHW. Returns NCHW."""
    N, C, H, W = x_nchw.shape
    WC, R = C * W, N * H

    # NCHW -> (N, H, C, W) -> (N*H, C*W): cheap transpose (minor dim W is kept),
    # and no explicit zero-padding pass -- padding lives in the A / B matrices.
    x = jnp.transpose(x_nchw, (0, 2, 1, 3)).reshape(R, WC).astype(jnp.float32)

    a = _shift_matrices(N, H).astype(MATMUL_DTYPE)            # (3, R, R)
    b1m = _banded_weights(w1_oihw, W).astype(MATMUL_DTYPE)    # (3, WC, WC)
    b2m = _banded_weights(w2_oihw, W).astype(MATMUL_DTYPE)
    # Per-channel mean/E[x^2]: block-diagonal averaging matrix (channel = lane//W).
    p = (jnp.kron(jnp.eye(C, dtype=jnp.float32),
                  jnp.ones((W, W), jnp.float32)) / float(N * H * W))

    def per_lane(v):  # (C,) -> (1, C*W) with lane c*W + w -> v[c]
        return jnp.repeat(v.astype(jnp.float32), W).reshape(1, WC)

    vmem = pl.BlockSpec(memory_space=pltpu.MemorySpace.VMEM)
    # The whole problem is a few vregs, so a single grid-less invocation with
    # full-array VMEM blocks is the right shape here.  For realistic ResNet
    # sizes: tile over N / H with a grid + dimension_semantics=("parallel",...)
    # (2 TensorCores on v7x) and re-derive the VMEM budget (64 MiB on v7x).
    out = pl.pallas_call(
        _make_resblock_kernel(R, WC),
        out_shape=jax.ShapeDtypeStruct((R, WC), jnp.float32),
        in_specs=[vmem] * 9,
        out_specs=vmem,
    )(x, a, b1m, b2m, p, per_lane(g1), per_lane(b1), per_lane(g2), per_lane(b2))

    return jnp.transpose(out.reshape(N, H, C, W), (0, 2, 1, 3))   # -> NCHW


def _reference_forward(x, w1, w2, g1, b1, g2, b2):
    """Pure-JAX reference (NCHW), mirrors the PyTorch forward in train mode."""
    def conv(x, w):
        return lax.conv_general_dilated(
            x, w, window_strides=(1, 1), padding="SAME",
            dimension_numbers=("NCHW", "OIHW", "NCHW"))

    def bn(x, g, b):
        mean = jnp.mean(x, axis=(0, 2, 3), keepdims=True)
        var = jnp.mean((x - mean) ** 2, axis=(0, 2, 3), keepdims=True)
        return ((x - mean) * lax.rsqrt(var + EPS)
                * g.reshape(1, -1, 1, 1) + b.reshape(1, -1, 1, 1))

    out = jax.nn.relu(bn(conv(x, w1), g1, b1))
    out = bn(conv(out, w2), g2, b2)
    return jax.nn.relu(out + x)


if __name__ == "__main__":
    N, C, H, W = 2, 8, 16, 16   # n_conv_filters = 8  ->  C*W = 128 lanes
    key = jax.random.PRNGKey(0)
    kx, kw1, kw2, kg1, kb1, kg2, kb2 = jax.random.split(key, 7)

    x = jax.random.normal(kx, (N, C, H, W), dtype=jnp.float32)
    w1 = 0.1 * jax.random.normal(kw1, (C, C, 3, 3), dtype=jnp.float32)  # OIHW
    w2 = 0.1 * jax.random.normal(kw2, (C, C, 3, 3), dtype=jnp.float32)
    g1 = 1.0 + 0.1 * jax.random.normal(kg1, (C,), dtype=jnp.float32)
    b1 = 0.1 * jax.random.normal(kb1, (C,), dtype=jnp.float32)
    g2 = 1.0 + 0.1 * jax.random.normal(kg2, (C,), dtype=jnp.float32)
    b2 = 0.1 * jax.random.normal(kb2, (C,), dtype=jnp.float32)

    out = resblock_forward(x, w1, w2, g1, b1, g2, b2)
    out = jax.block_until_ready(out)

    ref = _reference_forward(x, w1, w2, g1, b1, g2, b2)
    assert out.shape == (N, C, H, W)
    assert jnp.allclose(out, ref, atol=2e-2, rtol=2e-2), (
        float(jnp.max(jnp.abs(out - ref))))

    print("KERNEL_OK")
</pallas_src>

<mosaic_0001>
module attributes {stable_mosaic.version = 11 : i64} {
  func.func @kernel(%arg0: memref<32x128xf32, #tpu.memory_space<vmem>>, %arg1: memref<3x32x32xf32, #tpu.memory_space<vmem>>, %arg2: memref<3x128x128xf32, #tpu.memory_space<vmem>>, %arg3: memref<3x128x128xf32, #tpu.memory_space<vmem>>, %arg4: memref<128x128xf32, #tpu.memory_space<vmem>>, %arg5: memref<1x128xf32, #tpu.memory_space<vmem>>, %arg6: memref<1x128xf32, #tpu.memory_space<vmem>>, %arg7: memref<1x128xf32, #tpu.memory_space<vmem>>, %arg8: memref<1x128xf32, #tpu.memory_space<vmem>>, %arg9: memref<32x128xf32, #tpu.memory_space<vmem>>) attributes {dimension_semantics = [], scalar_prefetch = 0 : i64, scratch_operands = 0 : i64, tpu.core_type = #tpu.core_type<tc>} {
    %c0 = arith.constant 0 : index
    %c0_0 = arith.constant 0 : index
    %0 = vector.load %arg0[%c0, %c0_0] : memref<32x128xf32, #tpu.memory_space<vmem>>, vector<32x128xf32>
    %c0_1 = arith.constant 0 : index
    %c0_2 = arith.constant 0 : index
    %1 = vector.load %arg4[%c0_1, %c0_2] : memref<128x128xf32, #tpu.memory_space<vmem>>, vector<128x128xf32>
    %cst = arith.constant 0.000000e+00 : f32
    %2 = vector.broadcast %cst : f32 to vector<32x128xf32>
    %c0_3 = arith.constant 0 : index
    %c0_4 = arith.constant 0 : index
    %c0_5 = arith.constant 0 : index
    %3 = vector.load %arg1[%c0_3, %c0_4, %c0_5] : memref<3x32x32xf32, #tpu.memory_space<vmem>>, vector<1x32x32xf32>
    %4 = vector.shape_cast %3 : vector<1x32x32xf32> to vector<32x32xf32>
    %cst_6 = arith.constant dense<0.000000e+00> : vector<32x128xf32>
    %5 = tpu.matmul %4, %0, %cst_6 {dimension_numbers = #tpu.dot_dimension_numbers<[1], [0], [0], [1], [0, 0, 1, 1], [], []>} : vector<32x32xf32>, vector<32x128xf32>, vector<32x128xf32> -> vector<32x128xf32>
    %c0_7 = arith.constant 0 : index
    %c0_8 = arith.constant 0 : index
    %c0_9 = arith.constant 0 : index
    %6 = vector.load %arg2[%c0_7, %c0_8, %c0_9] : memref<3x128x128xf32, #tpu.memory_space<vmem>>, vector<1x128x128xf32>
    %7 = vector.shape_cast %6 : vector<1x128x128xf32> to vector<128x128xf32>
    %cst_10 = arith.constant dense<0.000000e+00> : vector<32x128xf32>
    %8 = tpu.matmul %5, %7, %cst_10 {dimension_numbers = #tpu.dot_dimension_numbers<[1], [0], [0], [1], [0, 0, 1, 1], [], []>} : vector<32x128xf32>, vector<128x128xf32>, vector<32x128xf32> -> vector<32x128xf32>
    %9 = arith.addf %2, %8 : vector<32x128xf32>
    %c1 = arith.constant 1 : index
    %c0_11 = arith.constant 0 : index
    %c0_12 = arith.constant 0 : index
    %10 = vector.load %arg1[%c1, %c0_11, %c0_12] : memref<3x32x32xf32, #tpu.memory_space<vmem>>, vector<1x32x32xf32>
    %11 = vector.shape_cast %10 : vector<1x32x32xf32> to vector<32x32xf32>
    %cst_13 = arith.constant dense<0.000000e+00> : vector<32x128xf32>
    %12 = tpu.matmul %11, %0, %cst_13 {dimension_numbers = #tpu.dot_dimension_numbers<[1], [0], [0], [1], [0, 0, 1, 1], [], []>} : vector<32x32xf32>, vector<32x128xf32>, vector<32x128xf32> -> vector<32x128xf32>
    %c1_14 = arith.constant 1 : index
    %c0_15 = arith.constant 0 : index
    %c0_16 = arith.constant 0 : index
    %13 = vector.load %arg2[%c1_14, %c0_15, %c0_16] : memref<3x128x128xf32, #tpu.memory_space<vmem>>, vector<1x128x128xf32>
    %14 = vector.shape_cast %13 : vector<1x128x128xf32> to vector<128x128xf32>
    %cst_17 = arith.constant dense<0.000000e+00> : vector<32x128xf32>
    %15 = tpu.matmul %12, %14, %cst_17 {dimension_numbers = #tpu.dot_dimension_numbers<[1], [0], [0], [1], [0, 0, 1, 1], [], []>} : vector<32x128xf32>, vector<128x128xf32>, vector<32x128xf32> -> vector<32x128xf32>
    %16 = arith.addf %9, %15 : vector<32x128xf32>
    %c2 = arith.constant 2 : index
    %c0_18 = arith.constant 0 : index
    %c0_19 = arith.constant 0 : index
    %17 = vector.load %arg1[%c2, %c0_18, %c0_19] : memref<3x32x32xf32, #tpu.memory_space<vmem>>, vector<1x32x32xf32>
    %18 = vector.shape_cast %17 : vector<1x32x32xf32> to vector<32x32xf32>
    %cst_20 = arith.constant dense<0.000000e+00> : vector<32x128xf32>
    %19 = tpu.matmul %18, %0, %cst_20 {dimension_numbers = #tpu.dot_dimension_numbers<[1], [0], [0], [1], [0, 0, 1, 1], [], []>} : vector<32x32xf32>, vector<32x128xf32>, vector<32x128xf32> -> vector<32x128xf32>
    %c2_21 = arith.constant 2 : index
    %c0_22 = arith.constant 0 : index
    %c0_23 = arith.constant 0 : index
    %20 = vector.load %arg2[%c2_21, %c0_22, %c0_23] : memref<3x128x128xf32, #tpu.memory_space<vmem>>, vector<1x128x128xf32>
    %21 = vector.shape_cast %20 : vector<1x128x128xf32> to vector<128x128xf32>
    %cst_24 = arith.constant dense<0.000000e+00> : vector<32x128xf32>
    %22 = tpu.matmul %19, %21, %cst_24 {dimension_numbers = #tpu.dot_dimension_numbers<[1], [0], [0], [1], [0, 0, 1, 1], [], []>} : vector<32x128xf32>, vector<128x128xf32>, vector<32x128xf32> -> vector<32x128xf32>
    %23 = arith.addf %16, %22 : vector<32x128xf32>
    %c0_25 = arith.constant 0 : index
    %c0_26 = arith.constant 0 : index
    %24 = vector.load %arg5[%c0_25, %c0_26] : memref<1x128xf32, #tpu.memory_space<vmem>>, vector<1x128xf32>
    %c0_27 = arith.constant 0 : index
    %c0_28 = arith.constant 0 : index
    %25 = vector.load %arg6[%c0_27, %c0_28] : memref<1x128xf32, #tpu.memory_space<vmem>>, vector<1x128xf32>
    %cst_29 = arith.constant dense<0.000000e+00> : vector<128xf32>
    %26 = vector.multi_reduction <add>, %23, %cst_29 [0] : vector<32x128xf32> to vector<128xf32>
    %27 = vector.shape_cast %26 : vector<128xf32> to vector<1x128xf32>
    %28 = arith.mulf %23, %23 : vector<32x128xf32>
    %cst_30 = arith.constant dense<0.000000e+00> : vector<128xf32>
    %29 = vector.multi_reduction <add>, %28, %cst_30 [0] : vector<32x128xf32> to vector<128xf32>
    %30 = vector.shape_cast %29 : vector<128xf32> to vector<1x128xf32>
    %cst_31 = arith.constant dense<0.000000e+00> : vector<1x128xf32>
    %31 = tpu.matmul %27, %1, %cst_31 {dimension_numbers = #tpu.dot_dimension_numbers<[1], [0], [0], [1], [0, 0, 1, 1], [], []>} : vector<1x128xf32>, vector<128x128xf32>, vector<1x128xf32> -> vector<1x128xf32>
    %cst_32 = arith.constant dense<0.000000e+00> : vector<1x128xf32>
    %32 = tpu.matmul %30, %1, %cst_32 {dimension_numbers = #tpu.dot_dimension_numbers<[1], [0], [0], [1], [0, 0, 1, 1], [], []>} : vector<1x128xf32>, vector<128x128xf32>, vector<1x128xf32> -> vector<1x128xf32>
    %33 = arith.mulf %31, %31 : vector<1x128xf32>
    %34 = arith.subf %32, %33 : vector<1x128xf32>
    %cst_33 = arith.constant 9.99999974E-6 : f32
    %35 = vector.broadcast %cst_33 : f32 to vector<1x128xf32>
    %36 = arith.addf %34, %35 : vector<1x128xf32>
    %37 = math.rsqrt %36 : vector<1x128xf32>
    %38 = arith.mulf %24, %37 : vector<1x128xf32>
    %39 = vector.broadcast %38 : vector<1x128xf32> to vector<32x128xf32>
    %40 = arith.mulf %23, %39 : vector<32x128xf32>
    %41 = arith.mulf %31, %38 : vector<1x128xf32>
    %42 = arith.subf %25, %41 : vector<1x128xf32>
    %43 = vector.broadcast %42 : vector<1x128xf32> to vector<32x128xf32>
    %44 = arith.addf %40, %43 : vector<32x128xf32>
    %cst_34 = arith.constant 0.000000e+00 : f32
    %45 = vector.broadcast %cst_34 : f32 to vector<32x128xf32>
    %46 = arith.maximumf %44, %45 : vector<32x128xf32>
    %cst_35 = arith.constant 0.000000e+00 : f32
    %47 = vector.broadcast %cst_35 : f32 to vector<32x128xf32>
    %c0_36 = arith.constant 0 : index
    %c0_37 = arith.constant 0 : index
    %c0_38 = arith.constant 0 : index
    %48 = vector.load %arg1[%c0_36, %c0_37, %c0_38] : memref<3x32x32xf32, #tpu.memory_space<vmem>>, vector<1x32x32xf32>
    %49 = vector.shape_cast %48 : vector<1x32x32xf32> to vector<32x32xf32>
    %cst_39 = arith.constant dense<0.000000e+00> : vector<32x128xf32>
    %50 = tpu.matmul %49, %46, %cst_39 {dimension_numbers = #tpu.dot_dimension_numbers<[1], [0], [0], [1], [0, 0, 1, 1], [], []>} : vector<32x32xf32>, vector<32x128xf32>, vector<32x128xf32> -> vector<32x128xf32>
    %c0_40 = arith.constant 0 : index
    %c0_41 = arith.constant 0 : index
    %c0_42 = arith.constant 0 : index
    %51 = vector.load %arg3[%c0_40, %c0_41, %c0_42] : memref<3x128x128xf32, #tpu.memory_space<vmem>>, vector<1x128x128xf32>
    %52 = vector.shape_cast %51 : vector<1x128x128xf32> to vector<128x128xf32>
    %cst_43 = arith.constant dense<0.000000e+00> : vector<32x128xf32>
    %53 = tpu.matmul %50, %52, %cst_43 {dimension_numbers = #tpu.dot_dimension_numbers<[1], [0], [0], [1], [0, 0, 1, 1], [], []>} : vector<32x128xf32>, vector<128x128xf32>, vector<32x128xf32> -> vector<32x128xf32>
    %54 = arith.addf %47, %53 : vector<32x128xf32>
    %c1_44 = arith.constant 1 : index
    %c0_45 = arith.constant 0 : index
    %c0_46 = arith.constant 0 : index
    %55 = vector.load %arg1[%c1_44, %c0_45, %c0_46] : memref<3x32x32xf32, #tpu.memory_space<vmem>>, vector<1x32x32xf32>
    %56 = vector.shape_cast %55 : vector<1x32x32xf32> to vector<32x32xf32>
    %cst_47 = arith.constant dense<0.000000e+00> : vector<32x128xf32>
    %57 = tpu.matmul %56, %46, %cst_47 {dimension_numbers = #tpu.dot_dimension_numbers<[1], [0], [0], [1], [0, 0, 1, 1], [], []>} : vector<32x32xf32>, vector<32x128xf32>, vector<32x128xf32> -> vector<32x128xf32>
    %c1_48 = arith.constant 1 : index
    %c0_49 = arith.constant 0 : index
    %c0_50 = arith.constant 0 : index
    %58 = vector.load %arg3[%c1_48, %c0_49, %c0_50] : memref<3x128x128xf32, #tpu.memory_space<vmem>>, vector<1x128x128xf32>
    %59 = vector.shape_cast %58 : vector<1x128x128xf32> to vector<128x128xf32>
    %cst_51 = arith.constant dense<0.000000e+00> : vector<32x128xf32>
    %60 = tpu.matmul %57, %59, %cst_51 {dimension_numbers = #tpu.dot_dimension_numbers<[1], [0], [0], [1], [0, 0, 1, 1], [], []>} : vector<32x128xf32>, vector<128x128xf32>, vector<32x128xf32> -> vector<32x128xf32>
    %61 = arith.addf %54, %60 : vector<32x128xf32>
    %c2_52 = arith.constant 2 : index
    %c0_53 = arith.constant 0 : index
    %c0_54 = arith.constant 0 : index
    %62 = vector.load %arg1[%c2_52, %c0_53, %c0_54] : memref<3x32x32xf32, #tpu.memory_space<vmem>>, vector<1x32x32xf32>
    %63 = vector.shape_cast %62 : vector<1x32x32xf32> to vector<32x32xf32>
    %cst_55 = arith.constant dense<0.000000e+00> : vector<32x128xf32>
    %64 = tpu.matmul %63, %46, %cst_55 {dimension_numbers = #tpu.dot_dimension_numbers<[1], [0], [0], [1], [0, 0, 1, 1], [], []>} : vector<32x32xf32>, vector<32x128xf32>, vector<32x128xf32> -> vector<32x128xf32>
    %c2_56 = arith.constant 2 : index
    %c0_57 = arith.constant 0 : index
    %c0_58 = arith.constant 0 : index
    %65 = vector.load %arg3[%c2_56, %c0_57, %c0_58] : memref<3x128x128xf32, #tpu.memory_space<vmem>>, vector<1x128x128xf32>
    %66 = vector.shape_cast %65 : vector<1x128x128xf32> to vector<128x128xf32>
    %cst_59 = arith.constant dense<0.000000e+00> : vector<32x128xf32>
    %67 = tpu.matmul %64, %66, %cst_59 {dimension_numbers = #tpu.dot_dimension_numbers<[1], [0], [0], [1], [0, 0, 1, 1], [], []>} : vector<32x128xf32>, vector<128x128xf32>, vector<32x128xf32> -> vector<32x128xf32>
    %68 = arith.addf %61, %67 : vector<32x128xf32>
    %c0_60 = arith.constant 0 : index
    %c0_61 = arith.constant 0 : index
    %69 = vector.load %arg7[%c0_60, %c0_61] : memref<1x128xf32, #tpu.memory_space<vmem>>, vector<1x128xf32>
    %c0_62 = arith.constant 0 : index
    %c0_63 = arith.constant 0 : index
    %70 = vector.load %arg8[%c0_62, %c0_63] : memref<1x128xf32, #tpu.memory_space<vmem>>, vector<1x128xf32>
    %cst_64 = arith.constant dense<0.000000e+00> : vector<128xf32>
    %71 = vector.multi_reduction <add>, %68, %cst_64 [0] : vector<32x128xf32> to vector<128xf32>
    %72 = vector.shape_cast %71 : vector<128xf32> to vector<1x128xf32>
    %73 = arith.mulf %68, %68 : vector<32x128xf32>
    %cst_65 = arith.constant dense<0.000000e+00> : vector<128xf32>
    %74 = vector.multi_reduction <add>, %73, %cst_65 [0] : vector<32x128xf32> to vector<128xf32>
    %75 = vector.shape_cast %74 : vector<128xf32> to vector<1x128xf32>
    %cst_66 = arith.constant dense<0.000000e+00> : vector<1x128xf32>
    %76 = tpu.matmul %72, %1, %cst_66 {dimension_numbers = #tpu.dot_dimension_numbers<[1], [0], [0], [1], [0, 0, 1, 1], [], []>} : vector<1x128xf32>, vector<128x128xf32>, vector<1x128xf32> -> vector<1x128xf32>
    %cst_67 = arith.constant dense<0.000000e+00> : vector<1x128xf32>
    %77 = tpu.matmul %75, %1, %cst_67 {dimension_numbers = #tpu.dot_dimension_numbers<[1], [0], [0], [1], [0, 0, 1, 1], [], []>} : vector<1x128xf32>, vector<128x128xf32>, vector<1x128xf32> -> vector<1x128xf32>
    %78 = arith.mulf %76, %76 : vector<1x128xf32>
    %79 = arith.subf %77, %78 : vector<1x128xf32>
    %cst_68 = arith.constant 9.99999974E-6 : f32
    %80 = vector.broadcast %cst_68 : f32 to vector<1x128xf32>
    %81 = arith.addf %79, %80 : vector<1x128xf32>
    %82 = math.rsqrt %81 : vector<1x128xf32>
    %83 = arith.mulf %69, %82 : vector<1x128xf32>
    %84 = vector.broadcast %83 : vector<1x128xf32> to vector<32x128xf32>
    %85 = arith.mulf %68, %84 : vector<32x128xf32>
    %86 = arith.mulf %76, %83 : vector<1x128xf32>
    %87 = arith.subf %70, %86 : vector<1x128xf32>
    %88 = vector.broadcast %87 : vector<1x128xf32> to vector<32x128xf32>
    %89 = arith.addf %85, %88 : vector<32x128xf32>
    %90 = arith.addf %89, %0 : vector<32x128xf32>
    %cst_69 = arith.constant 0.000000e+00 : f32
    %91 = vector.broadcast %cst_69 : f32 to vector<32x128xf32>
    %92 = arith.maximumf %90, %91 : vector<32x128xf32>
    %c0_70 = arith.constant 0 : index
    %c0_71 = arith.constant 0 : index
    %93 = vector.load %arg9[%c0_70, %c0_71] : memref<32x128xf32, #tpu.memory_space<vmem>>, vector<32x128xf32>
    tpu.vector_store %arg9[%c0_70, %c0_71], %92 {strides = array<i32>} : memref<32x128xf32, #tpu.memory_space<vmem>>, vector<32x128xf32>,
    return
  }
}

</mosaic_0001>

<llo_original>
// kernel: tpu_custom_call.1
$region0: #{tpu_custom_call.1}
  #allocation0 [shape = 'u32[]', space=smem, size = 0x4, offset = 0x4, fixed_abs, tag = 'smem constant byte address 0x4 - core index']
  #allocation1 [shape = 'u32[144,128]{1,0:T(1,128)}', space=vmem, size = 0x12000, scoped, tag = 'internal scratch']
  %s0 = inlined_call_operand.hbm [shape: f32[32,128], index: 0, kind: input, shape index: {}]
  %s1 = inlined_call_operand.hbm [shape: f32[3,32,32], index: 1, kind: input, shape index: {}]
  %s2 = inlined_call_operand.hbm [shape: f32[3,128,128], index: 2, kind: input, shape index: {}]
  %s3 = inlined_call_operand.hbm [shape: f32[3,128,128], index: 3, kind: input, shape index: {}]
  %s4 = inlined_call_operand.hbm [shape: f32[128,128], index: 4, kind: input, shape index: {}]
  %s5 = inlined_call_operand.vmem [shape: f32[1,128], index: 5, kind: input, shape index: {}]
  %s6 = inlined_call_operand.vmem [shape: f32[1,128], index: 6, kind: input, shape index: {}]
  %s7 = inlined_call_operand.vmem [shape: f32[1,128], index: 7, kind: input, shape index: {}]
  %s8 = inlined_call_operand.vmem [shape: f32[1,128], index: 8, kind: input, shape index: {}]
  %s9 = inlined_call_operand.hbm [shape: f32[32,128], index: 9, kind: output, shape index: {}]
  %s10 = sld [smem:[#allocation0]]
  $region66: #{tpu_custom_call.1} parent=0
    _
  %s12 = ssub.s32 1, %s10
  %s13 = scalar_select 0, %s12, %s10
  $region1: #{tpu_custom_call.1} parent=0
    #allocation2 [shape = 'u8[16384]{0}', space=vmem, size = 0x4000, scoped, tag = 'input window, operand 0, single buffered']
    #allocation3 [shape = 's32[1]{0}', space=sflag, size = 0x4, scoped, tag = 'scoped memory for tpu_custom_call.1']
    #allocation4 [shape = 's32[1]{0}', space=sflag, size = 0x4, scoped, tag = 'scoped memory for tpu_custom_call.1']
    #allocation5 [shape = 'u8[49152]{0}', space=vmem, size = 0xc000, scoped, tag = 'input window, operand 1, single buffered']
    #allocation6 [shape = 's32[1]{0}', space=sflag, size = 0x4, scoped, tag = 'scoped memory for tpu_custom_call.1']
    #allocation7 [shape = 'u8[196608]{0}', space=vmem, size = 0x30000, scoped, tag = 'input window, operand 2, single buffered']
    #allocation8 [shape = 'u8[196608]{0}', space=vmem, size = 0x30000, scoped, tag = 'input window, operand 3, single buffered']
    #allocation9 [shape = 's32[1]{0}', space=sflag, size = 0x4, scoped, tag = 'scoped memory for tpu_custom_call.1']
    #allocation10 [shape = 'u8[65536]{0}', space=vmem, size = 0x10000, scoped, tag = 'input window, operand 4, single buffered']
    #allocation11 [shape = 'u8[16384]{0}', space=vmem, size = 0x4000, scoped, tag = 'output window, operand 0, single buffered']
    %14 = vsyncpa [#allocation3], 0
    %15 = vsyncpa [#allocation6], 0
    %16 = vsyncpa [#allocation9], 0
    %17 = vsyncpa [#allocation4], 0
    // Predicated region
    $region2: #{tpu_custom_call.1} parent=1 // pred_check
      _
    $region3: #{tpu_custom_call.1} parent=1 // pred_check_branch
      %19 = sbr.rel (0) target = $region5
    $region4: #{tpu_custom_call.1} parent=1 // pred_region
      %s21 = ssub.s32 512, 512
      %22 = vsyncadd [#allocation3], %s21
      %s23 = sshll.u32 [#allocation2], 4
      %s24 = int_to_ptr.vmem [resolvable:$true] %s23
      %29 = dma.hbm_to_vmem [thread:$0]  %s0, 512, %s24, [#allocation3], 128, 128, 8
    $region5: #{tpu_custom_call.1} parent=1 // pred_fallthru
      _
    // Predicated region
    $region6: #{tpu_custom_call.1} parent=1 // pred_check
      _
    $region7: #{tpu_custom_call.1} parent=1 // pred_check_branch
      %31 = sbr.rel (0) target = $region9
    $region8: #{tpu_custom_call.1} parent=1 // pred_region
      %s33 = ssub.s32 1536, 1536
      %34 = vsyncadd [#allocation6], %s33
      %s35 = sshll.u32 [#allocation5], 4
      %s36 = int_to_ptr.vmem [resolvable:$true] %s35
      %41 = dma.hbm_to_vmem [thread:$0]  %s1, 1536, %s36, [#allocation6], 128, 128, 8
    $region9: #{tpu_custom_call.1} parent=1 // pred_fallthru
      _
    // Predicated region
    $region10: #{tpu_custom_call.1} parent=1 // pred_check
      _
    $region11: #{tpu_custom_call.1} parent=1 // pred_check_branch
      %43 = sbr.rel (0) target = $region13
    $region12: #{tpu_custom_call.1} parent=1 // pred_region
      %s45 = ssub.s32 6144, 6144
      %46 = vsyncadd [#allocation6], %s45
      %s47 = sshll.u32 [#allocation7], 4
      %s48 = int_to_ptr.vmem [resolvable:$true] %s47
      %53 = dma.hbm_to_vmem [thread:$0]  %s2, 6144, %s48, [#allocation6], 128, 128, 8
    $region13: #{tpu_custom_call.1} parent=1 // pred_fallthru
      _
    // Predicated region
    $region14: #{tpu_custom_call.1} parent=1 // pred_check
      _
    $region15: #{tpu_custom_call.1} parent=1 // pred_check_branch
      %55 = sbr.rel (0) target = $region17
    $region16: #{tpu_custom_call.1} parent=1 // pred_region
      %s57 = ssub.s32 6144, 6144
      %58 = vsyncadd [#allocation9], %s57
      %s59 = sshll.u32 [#allocation8], 4
      %s60 = int_to_ptr.vmem [resolvable:$true] %s59
      %65 = dma.hbm_to_vmem [thread:$0]  %s3, 6144, %s60, [#allocation9], 128, 128, 8
    $region17: #{tpu_custom_call.1} parent=1 // pred_fallthru
      _
    // Predicated region
    $region18: #{tpu_custom_call.1} parent=1 // pred_check
      _
    $region19: #{tpu_custom_call.1} parent=1 // pred_check_branch
      %67 = sbr.rel (0) target = $region21
    $region20: #{tpu_custom_call.1} parent=1 // pred_region
      %s69 = ssub.s32 2048, 2048
      %70 = vsyncadd [#allocation9], %s69
      %s71 = sshll.u32 [#allocation10], 4
      %s72 = int_to_ptr.vmem [resolvable:$true] %s71
      %77 = dma.hbm_to_vmem [thread:$0]  %s4, 2048, %s72, [#allocation9], 128, 128, 8
    $region21: #{tpu_custom_call.1} parent=1 // pred_fallthru
      _
    // Predicated region
    $region22: #{tpu_custom_call.1} parent=1 // pred_check
      _
    $region23: #{tpu_custom_call.1} parent=1 // pred_check_branch
      %79 = sbr.rel (0) target = $region25
    $region24: #{tpu_custom_call.1} parent=1 // pred_region
      _
    $region25: #{tpu_custom_call.1} parent=1 // pred_fallthru
      _
    // Predicated region
    $region26: #{tpu_custom_call.1} parent=1 // pred_check
      _
    $region27: #{tpu_custom_call.1} parent=1 // pred_check_branch
      %81 = sbr.rel (0) target = $region29
    $region28: #{tpu_custom_call.1} parent=1 // pred_region
      _
    $region29: #{tpu_custom_call.1} parent=1 // pred_fallthru
      _
    // Predicated region
    $region30: #{tpu_custom_call.1} parent=1 // pred_check
      _
    $region31: #{tpu_custom_call.1} parent=1 // pred_check_branch
      %83 = sbr.rel (0) target = $region33
    $region32: #{tpu_custom_call.1} parent=1 // pred_region
      _
    $region33: #{tpu_custom_call.1} parent=1 // pred_fallthru
      _
    // Predicated region
    $region34: #{tpu_custom_call.1} parent=1 // pred_check
      _
    $region35: #{tpu_custom_call.1} parent=1 // pred_check_branch
      %85 = sbr.rel (0) target = $region37
    $region36: #{tpu_custom_call.1} parent=1 // pred_region
      _
    $region37: #{tpu_custom_call.1} parent=1 // pred_fallthru
      _
    // Predicated region
    $region38: #{tpu_custom_call.1} parent=1 // pred_check
      _
    $region39: #{tpu_custom_call.1} parent=1 // pred_check_branch
      %87 = sbr.rel (0) target = $region41
    $region40: #{tpu_custom_call.1} parent=1 // pred_region
      %88 = dma.done [#allocation3], 512
    $region41: #{tpu_custom_call.1} parent=1 // pred_fallthru
      _
    // Predicated region
    $region42: #{tpu_custom_call.1} parent=1 // pred_check
      _
    $region43: #{tpu_custom_call.1} parent=1 // pred_check_branch
      %90 = sbr.rel (0) target = $region45
    $region44: #{tpu_custom_call.1} parent=1 // pred_region
      %91 = dma.done [#allocation6], 1536
    $region45: #{tpu_custom_call.1} parent=1 // pred_fallthru
      _
    // Predicated region
    $region46: #{tpu_custom_call.1} parent=1 // pred_check
      _
    $region47: #{tpu_custom_call.1} parent=1 // pred_check_branch
      %93 = sbr.rel (0) target = $region49
    $region48: #{tpu_custom_call.1} parent=1 // pred_region
      %94 = dma.done [#allocation6], 6144
    $region49: #{tpu_custom_call.1} parent=1 // pred_fallthru
      _
    // Predicated region
    $region50: #{tpu_custom_call.1} parent=1 // pred_check
      _
    $region51: #{tpu_custom_call.1} parent=1 // pred_check_branch
      %96 = sbr.rel (0) target = $region53
    $region52: #{tpu_custom_call.1} parent=1 // pred_region
      %97 = dma.done [#allocation9], 6144
    $region53: #{tpu_custom_call.1} parent=1 // pred_fallthru
      _
    // Predicated region
    $region54: #{tpu_custom_call.1} parent=1 // pred_check
      _
    $region55: #{tpu_custom_call.1} parent=1 // pred_check_branch
      %99 = sbr.rel (0) target = $region57
    $region56: #{tpu_custom_call.1} parent=1 // pred_region
      %100 = dma.done [#allocation9], 2048
    $region57: #{tpu_custom_call.1} parent=1 // pred_fallthru
      _
    %v101 = vld [vmem:[#allocation2] sm:$0xff]
    %v102 = vld [vmem:[#allocation2 + $0x8] sm:$0xff]
    %v103 = vld [vmem:[#allocation2 + $0x10] sm:$0xff]
    %v104 = vld [vmem:[#allocation2 + $0x18] sm:$0xff]
    %v105 = vld [vmem:[#allocation10] sm:$0xff]
    %v106 = vld [vmem:[#allocation10 + $0x8] sm:$0xff]
    %v107 = vld [vmem:[#allocation10 + $0x10] sm:$0xff]
    %v108 = vld [vmem:[#allocation10 + $0x18] sm:$0xff]
    %v109 = vld [vmem:[#allocation10 + $0x20] sm:$0xff]
    %v110 = vld [vmem:[#allocation10 + $0x28] sm:$0xff]
    %v111 = vld [vmem:[#allocation10 + $0x30] sm:$0xff]
    %v112 = vld [vmem:[#allocation10 + $0x38] sm:$0xff]
    %v113 = vld [vmem:[#allocation10 + $0x40] sm:$0xff]
    %v114 = vld [vmem:[#allocation10 + $0x48] sm:$0xff]
    %v115 = vld [vmem:[#allocation10 + $0x50] sm:$0xff]
    %v116 = vld [vmem:[#allocation10 + $0x58] sm:$0xff]
    %v117 = vld [vmem:[#allocation10 + $0x60] sm:$0xff]
    %v118 = vld [vmem:[#allocation10 + $0x68] sm:$0xff]
    %v119 = vld [vmem:[#allocation10 + $0x70] sm:$0xff]
    %v120 = vld [vmem:[#allocation10 + $0x78] sm:$0xff]
    %v121 = vld [vmem:[#allocation5] sm:$0xff]
    %v122 = vld [vmem:[#allocation5 + $0x8] sm:$0xff]
    %v123 = vld [vmem:[#allocation5 + $0x10] sm:$0xff]
    %v124 = vld [vmem:[#allocation5 + $0x18] sm:$0xff]
    %vm125 = vcmask 261120
    %v127 = vsel %vm125, %v121, 0
    %v130 = vsel %vm125, %v122, 0
    %v133 = vsel %vm125, %v123, 0
    %v136 = vsel %vm125, %v124, 0
    %138 = vmatprep.subr.mxu0 0.0
    %139 = vmatpush1.msra.mxu0 %v101
    %140 = vmatprep.subr.mxu0 0.0
    %141 = vmatpush1.msra.mxu0 %v102
    %142 = vmatprep.subr.mxu0 0.0
    %143 = vmatpush1.msra.mxu0 %v103
    %144 = vmatprep.subr.mxu0 0.0
    %145 = vmatpush1.msra.mxu0 %v104
    %146 = vmatprep.subr.mxu0 0.0
    %147 = vmatpush1.msra.mxu0 0.0
    %148 = vmatprep.subr.mxu0 0.0
    %149 = vmatpush1.msra.mxu0 0.0
    %150 = vmatprep.subr.mxu0 0.0
    %151 = vmatpush1.msra.mxu0 0.0
    %152 = vmatprep.subr.mxu0 0.0
    %153 = vmatpush1.msra.mxu0 0.0
    %154 = vmatprep.subr.mxu0 0.0
    %155 = vmatpush1.msra.mxu0 0.0
    %156 = vmatprep.subr.mxu0 0.0
    %157 = vmatpush1.msra.mxu0 0.0
    %158 = vmatprep.subr.mxu0 0.0
    %159 = vmatpush1.msra.mxu0 0.0
    %160 = vmatprep.subr.mxu0 0.0
    %161 = vmatpush1.msra.mxu0 0.0
    %162 = vmatprep.subr.mxu0 0.0
    %163 = vmatpush1.msra.mxu0 0.0
    %164 = vmatprep.subr.mxu0 0.0
    %165 = vmatpush1.msra.mxu0 0.0
    %166 = vmatprep.subr.mxu0 0.0
    %167 = vmatpush1.msra.mxu0 0.0
    %168 = vmatprep.subr.mxu0 0.0
    %169 = vmatpush1.msra.mxu0 0.0
    %170 = vmatprep.subr.mxu0 0.0
    %171 = vmatpush1.msra.mxu0 0.0
    %172 = vmatprep.subr.mxu0 0.0
    %173 = vmatpush1.msra.mxu0 0.0
    %174 = vmatprep.subr.mxu0 0.0
    %175 = vmatpush1.msra.mxu0 0.0
    %176 = vmatprep.subr.mxu0 0.0
    %177 = vmatpush1.msra.mxu0 0.0
    %178 = vmatprep.subr.mxu0 0.0
    %179 = vmatpush1.msra.mxu0 0.0
    %180 = vmatprep.subr.mxu0 0.0
    %181 = vmatpush1.msra.mxu0 0.0
    %182 = vmatprep.subr.mxu0 0.0
    %183 = vmatpush1.msra.mxu0 0.0
    %184 = vmatprep.subr.mxu0 0.0
    %185 = vmatpush1.msra.mxu0 0.0
    %186 = vmatprep.subr.mxu0 0.0
    %187 = vmatpush1.msra.mxu0 0.0
    %188 = vmatprep.subr.mxu0 0.0
    %189 = vmatpush1.msra.mxu0 0.0
    %190 = vmatprep.subr.mxu0 0.0
    %191 = vmatpush1.msra.mxu0 0.0
    %192 = vmatprep.subr.mxu0 0.0
    %193 = vmatpush1.msra.mxu0 0.0
    %194 = vmatprep.subr.mxu0 0.0
    %195 = vmatpush1.msra.mxu0 0.0
    %196 = vmatprep.subr.mxu0 0.0
    %197 = vmatpush1.msra.mxu0 0.0
    %198 = vmatprep.subr.mxu0 0.0
    %199 = vmatpush1.msra.mxu0 0.0
    %200 = vmatprep.subr.mxu0 0.0
    %201 = vmatpush1.msra.mxu0 0.0
    %202 = vmatprep.mubr.f32.mxu0 0.0
    %203 = vmatmul.mubr.f32.gmra.mrb[0].mxu0 %v127
    %v204 = vpop.f32.mrb[0].mxu0
    %v205 = vadd.f32 0.0, %v204
    %v206 = vpop.f32.mrb[0].mxu0
    %207 = vmatprep.mubr.f32.mxu0 0.0
    %208 = vmatmul.mubr.f32.gmra.mrb[0].mxu0 %v130
    %v209 = vpop.f32.mrb[0].mxu0
    %v210 = vadd.f32 0.0, %v209
    %v211 = vpop.f32.mrb[0].mxu0
    %212 = vmatprep.mubr.f32.mxu0 0.0
    %213 = vmatmul.mubr.f32.gmra.mrb[0].mxu0 %v133
    %v214 = vpop.f32.mrb[0].mxu0
    %v215 = vadd.f32 0.0, %v214
    %v216 = vpop.f32.mrb[0].mxu0
    %217 = vmatprep.mubr.f32.mxu0 0.0
    %218 = vmatmul.mubr.f32.gmra.mrb[0].mxu0 %v136
    %v219 = vpop.f32.mrb[0].mxu0
    %v220 = vadd.f32 0.0, %v219
    %v221 = vpop.f32.mrb[0].mxu0
    %222 = vdwg.mxu0
    %v223 = vld [vmem:[#allocation7] sm:$0xff]
    %v224 = vld [vmem:[#allocation7 + $0x8] sm:$0xff]
    %v225 = vld [vmem:[#allocation7 + $0x10] sm:$0xff]
    %v226 = vld [vmem:[#allocation7 + $0x18] sm:$0xff]
    %v227 = vld [vmem:[#allocation7 + $0x20] sm:$0xff]
    %v228 = vld [vmem:[#allocation7 + $0x28] sm:$0xff]
    %v229 = vld [vmem:[#allocation7 + $0x30] sm:$0xff]
    %v230 = vld [vmem:[#allocation7 + $0x38] sm:$0xff]
    %v231 = vld [vmem:[#allocation7 + $0x40] sm:$0xff]
    %v232 = vld [vmem:[#allocation7 + $0x48] sm:$0xff]
    %v233 = vld [vmem:[#allocation7 + $0x50] sm:$0xff]
    %v234 = vld [vmem:[#allocation7 + $0x58] sm:$0xff]
    %v235 = vld [vmem:[#allocation7 + $0x60] sm:$0xff]
    %v236 = vld [vmem:[#allocation7 + $0x68] sm:$0xff]
    %v237 = vld [vmem:[#allocation7 + $0x70] sm:$0xff]
    %v238 = vld [vmem:[#allocation7 + $0x78] sm:$0xff]
    %s239 = scalar_lea.vmem [#allocation5], 32
    %v240 = vld [vmem:[%s239] sm:$0xff]
    %v241 = vld [vmem:[%s239 + $0x8] sm:$0xff]
    %v242 = vld [vmem:[%s239 + $0x10] sm:$0xff]
    %v243 = vld [vmem:[%s239 + $0x18] sm:$0xff]
    %v245 = vsel %vm125, %v240, 0
    %v248 = vsel %vm125, %v241, 0
    %v251 = vsel %vm125, %v242, 0
    %v254 = vsel %vm125, %v243, 0
    %256 = vmatprep.subr.mxu0 0.0
    %257 = vmatpush1.msra.mxu0 %v101
    %258 = vmatprep.subr.mxu0 0.0
    %259 = vmatpush1.msra.mxu0 %v102
    %260 = vmatprep.subr.mxu0 0.0
    %261 = vmatpush1.msra.mxu0 %v103
    %262 = vmatprep.subr.mxu0 0.0
    %263 = vmatpush1.msra.mxu0 %v104
    %264 = vmatprep.subr.mxu0 0.0
    %265 = vmatpush1.msra.mxu0 0.0
    %266 = vmatprep.subr.mxu0 0.0
    %267 = vmatpush1.msra.mxu0 0.0
    %268 = vmatprep.subr.mxu0 0.0
    %269 = vmatpush1.msra.mxu0 0.0
    %270 = vmatprep.subr.mxu0 0.0
    %271 = vmatpush1.msra.mxu0 0.0
    %272 = vmatprep.subr.mxu0 0.0
    %273 = vmatpush1.msra.mxu0 0.0
    %274 = vmatprep.subr.mxu0 0.0
    %275 = vmatpush1.msra.mxu0 0.0
    %276 = vmatprep.subr.mxu0 0.0
    %277 = vmatpush1.msra.mxu0 0.0
    %278 = vmatprep.subr.mxu0 0.0
    %279 = vmatpush1.msra.mxu0 0.0
    %280 = vmatprep.subr.mxu0 0.0
    %281 = vmatpush1.msra.mxu0 0.0
    %282 = vmatprep.subr.mxu0 0.0
    %283 = vmatpush1.msra.mxu0 0.0
    %284 = vmatprep.subr.mxu0 0.0
    %285 = vmatpush1.msra.mxu0 0.0
    %286 = vmatprep.subr.mxu0 0.0
    %287 = vmatpush1.msra.mxu0 0.0
    %288 = vmatprep.subr.mxu0 0.0
    %289 = vmatpush1.msra.mxu0 0.0
    %290 = vmatprep.subr.mxu0 0.0
    %291 = vmatpush1.msra.mxu0 0.0
    %292 = vmatprep.subr.mxu0 0.0
    %293 = vmatpush1.msra.mxu0 0.0
    %294 = vmatprep.subr.mxu0 0.0
    %295 = vmatpush1.msra.mxu0 0.0
    %296 = vmatprep.subr.mxu0 0.0
    %297 = vmatpush1.msra.mxu0 0.0
    %298 = vmatprep.subr.mxu0 0.0
    %299 = vmatpush1.msra.mxu0 0.0
    %300 = vmatprep.subr.mxu0 0.0
    %301 = vmatpush1.msra.mxu0 0.0
    %302 = vmatprep.subr.mxu0 0.0
    %303 = vmatpush1.msra.mxu0 0.0
    %304 = vmatprep.subr.mxu0 0.0
    %305 = vmatpush1.msra.mxu0 0.0
    %306 = vmatprep.subr.mxu0 0.0
    %307 = vmatpush1.msra.mxu0 0.0
    %308 = vmatprep.subr.mxu0 0.0
    %309 = vmatpush1.msra.mxu0 0.0
    %310 = vmatprep.subr.mxu0 0.0
    %311 = vmatpush1.msra.mxu0 0.0
    %312 = vmatprep.subr.mxu0 0.0
    %313 = vmatpush1.msra.mxu0 0.0
    %314 = vmatprep.subr.mxu0 0.0
    %315 = vmatpush1.msra.mxu0 0.0
    %316 = vmatprep.subr.mxu0 0.0
    %317 = vmatpush1.msra.mxu0 0.0
    %318 = vmatprep.subr.mxu0 0.0
    %319 = vmatpush1.msra.mxu0 0.0
    %320 = vmatprep.mubr.f32.mxu0 0.0
    %321 = vmatmul.mubr.f32.gmra.mrb[0].mxu0 %v245
    %v322 = vpop.f32.mrb[0].mxu0
    %v323 = vadd.f32 0.0, %v322
    %v324 = vpop.f32.mrb[0].mxu0
    %325 = vmatprep.mubr.f32.mxu0 0.0
    %326 = vmatmul.mubr.f32.gmra.mrb[0].mxu0 %v248
    %v327 = vpop.f32.mrb[0].mxu0
    %v328 = vadd.f32 0.0, %v327
    %v329 = vpop.f32.mrb[0].mxu0
    %330 = vmatprep.mubr.f32.mxu0 0.0
    %331 = vmatmul.mubr.f32.gmra.mrb[0].mxu0 %v251
    %v332 = vpop.f32.mrb[0].mxu0
    %v333 = vadd.f32 0.0, %v332
    %v334 = vpop.f32.mrb[0].mxu0
    %335 = vmatprep.mubr.f32.mxu0 0.0
    %336 = vmatmul.mubr.f32.gmra.mrb[0].mxu0 %v254
    %v337 = vpop.f32.mrb[0].mxu0
    %v338 = vadd.f32 0.0, %v337
    %v339 = vpop.f32.mrb[0].mxu0
    %340 = vdwg.mxu0
    %s341 = scalar_lea.vmem [#allocation7], 128
    %v342 = vld [vmem:[%s341] sm:$0xff]
    %v343 = vld [vmem:[%s341 + $0x8] sm:$0xff]
    %v344 = vld [vmem:[%s341 + $0x10] sm:$0xff]
    %v345 = vld [vmem:[%s341 + $0x18] sm:$0xff]
    %v346 = vld [vmem:[%s341 + $0x20] sm:$0xff]
    %v347 = vld [vmem:[%s341 + $0x28] sm:$0xff]
    %v348 = vld [vmem:[%s341 + $0x30] sm:$0xff]
    %v349 = vld [vmem:[%s341 + $0x38] sm:$0xff]
    %v350 = vld [vmem:[%s341 + $0x40] sm:$0xff]
    %v351 = vld [vmem:[%s341 + $0x48] sm:$0xff]
    %v352 = vld [vmem:[%s341 + $0x50] sm:$0xff]
    %v353 = vld [vmem:[%s341 + $0x58] sm:$0xff]
    %v354 = vld [vmem:[%s341 + $0x60] sm:$0xff]
    %v355 = vld [vmem:[%s341 + $0x68] sm:$0xff]
    %v356 = vld [vmem:[%s341 + $0x70] sm:$0xff]
    %v357 = vld [vmem:[%s341 + $0x78] sm:$0xff]
    %358 = vmatprep.subr.mxu0 0.0
    %359 = vmatpush1.msra.mxu0 %v342
    %360 = vmatprep.subr.mxu0 0.0
    %361 = vmatpush1.msra.mxu0 %v343
    %362 = vmatprep.subr.mxu0 0.0
    %363 = vmatpush1.msra.mxu0 %v344
    %364 = vmatprep.subr.mxu0 0.0
    %365 = vmatpush1.msra.mxu0 %v345
    %366 = vmatprep.subr.mxu0 0.0
    %367 = vmatpush1.msra.mxu0 %v346
    %368 = vmatprep.subr.mxu0 0.0
    %369 = vmatpush1.msra.mxu0 %v347
    %370 = vmatprep.subr.mxu0 0.0
    %371 = vmatpush1.msra.mxu0 %v348
    %372 = vmatprep.subr.mxu0 0.0
    %373 = vmatpush1.msra.mxu0 %v349
    %374 = vmatprep.subr.mxu0 0.0
    %375 = vmatpush1.msra.mxu0 %v350
    %376 = vmatprep.subr.mxu0 0.0
    %377 = vmatpush1.msra.mxu0 %v351
    %378 = vmatprep.subr.mxu0 0.0
    %379 = vmatpush1.msra.mxu0 %v352
    %380 = vmatprep.subr.mxu0 0.0
    %381 = vmatpush1.msra.mxu0 %v353
    %382 = vmatprep.subr.mxu0 0.0
    %383 = vmatpush1.msra.mxu0 %v354
    %384 = vmatprep.subr.mxu0 0.0
    %385 = vmatpush1.msra.mxu0 %v355
    %386 = vmatprep.subr.mxu0 0.0
    %387 = vmatpush1.msra.mxu0 %v356
    %388 = vmatprep.subr.mxu0 0.0
    %389 = vmatpush1.msra.mxu0 %v357
    %390 = vmatprep.subr.mxu0 0.0
    %391 = vmatpush1.msra.mxu0 0.0
    %392 = vmatprep.subr.mxu0 0.0
    %393 = vmatpush1.msra.mxu0 0.0
    %394 = vmatprep.subr.mxu0 0.0
    %395 = vmatpush1.msra.mxu0 0.0
    %396 = vmatprep.subr.mxu0 0.0
    %397 = vmatpush1.msra.mxu0 0.0
    %398 = vmatprep.subr.mxu0 0.0
    %399 = vmatpush1.msra.mxu0 0.0
    %400 = vmatprep.subr.mxu0 0.0
    %401 = vmatpush1.msra.mxu0 0.0
    %402 = vmatprep.subr.mxu0 0.0
    %403 = vmatpush1.msra.mxu0 0.0
    %404 = vmatprep.subr.mxu0 0.0
    %405 = vmatpush1.msra.mxu0 0.0
    %406 = vmatprep.subr.mxu0 0.0
    %407 = vmatpush1.msra.mxu0 0.0
    %408 = vmatprep.subr.mxu0 0.0
    %409 = vmatpush1.msra.mxu0 0.0
    %410 = vmatprep.subr.mxu0 0.0
    %411 = vmatpush1.msra.mxu0 0.0
    %412 = vmatprep.subr.mxu0 0.0
    %413 = vmatpush1.msra.mxu0 0.0
    %414 = vmatprep.subr.mxu0 0.0
    %415 = vmatpush1.msra.mxu0 0.0
    %416 = vmatprep.subr.mxu0 0.0
    %417 = vmatpush1.msra.mxu0 0.0
    %418 = vmatprep.subr.mxu0 0.0
    %419 = vmatpush1.msra.mxu0 0.0
    %420 = vmatprep.subr.mxu0 0.0
    %421 = vmatpush1.msra.mxu0 0.0
    %422 = vmatprep.mubr.f32.mxu0 0.0
    %423 = vmatmul.mubr.f32.gmra.mrb[0].mxu0 %v323
    %v424 = vpop.f32.mrb[0].mxu0
    %v425 = vadd.f32 0.0, %v424
    %v426 = vpop.f32.mrb[0].mxu0
    %427 = vmatprep.mubr.f32.mxu0 0.0
    %428 = vmatmul.mubr.f32.gmra.mrb[0].mxu0 %v328
    %v429 = vpop.f32.mrb[0].mxu0
    %v430 = vadd.f32 0.0, %v429
    %v431 = vpop.f32.mrb[0].mxu0
    %432 = vmatprep.mubr.f32.mxu0 0.0
    %433 = vmatmul.mubr.f32.gmra.mrb[0].mxu0 %v333
    %v434 = vpop.f32.mrb[0].mxu0
    %v435 = vadd.f32 0.0, %v434
    %v436 = vpop.f32.mrb[0].mxu0
    %437 = vmatprep.mubr.f32.mxu0 0.0
    %438 = vmatmul.mubr.f32.gmra.mrb[0].mxu0 %v338
    %v439 = vpop.f32.mrb[0].mxu0
    %v440 = vadd.f32 0.0, %v439
    %v441 = vpop.f32.mrb[0].mxu0
    %442 = vdwg.mxu0
    %443 = vmatprep.subr.mxu0 0.0
    %444 = vmatpush1.msra.mxu0 %v223
    %445 = vmatprep.subr.mxu0 0.0
    %446 = vmatpush1.msra.mxu0 %v224
    %447 = vmatprep.subr.mxu0 0.0
    %448 = vmatpush1.msra.mxu0 %v225
    %449 = vmatprep.subr.mxu0 0.0
    %450 = vmatpush1.msra.mxu0 %v226
    %451 = vmatprep.subr.mxu0 0.0
    %452 = vmatpush1.msra.mxu0 %v227
    %453 = vmatprep.subr.mxu0 0.0
    %454 = vmatpush1.msra.mxu0 %v228
    %455 = vmatprep.subr.mxu0 0.0
    %456 = vmatpush1.msra.mxu0 %v229
    %457 = vmatprep.subr.mxu0 0.0
    %458 = vmatpush1.msra.mxu0 %v230
    %459 = vmatprep.subr.mxu0 0.0
    %460 = vmatpush1.msra.mxu0 %v231
    %461 = vmatprep.subr.mxu0 0.0
    %462 = vmatpush1.msra.mxu0 %v232
    %463 = vmatprep.subr.mxu0 0.0
    %464 = vmatpush1.msra.mxu0 %v233
    %465 = vmatprep.subr.mxu0 0.0
    %466 = vmatpush1.msra.mxu0 %v234
    %467 = vmatprep.subr.mxu0 0.0
    %468 = vmatpush1.msra.mxu0 %v235
    %469 = vmatprep.subr.mxu0 0.0
    %470 = vmatpush1.msra.mxu0 %v236
    %471 = vmatprep.subr.mxu0 0.0
    %472 = vmatpush1.msra.mxu0 %v237
    %473 = vmatprep.subr.mxu0 0.0
    %474 = vmatpush1.msra.mxu0 %v238
    %475 = vmatprep.subr.mxu0 0.0
    %476 = vmatpush1.msra.mxu0 0.0
    %477 = vmatprep.subr.mxu0 0.0
    %478 = vmatpush1.msra.mxu0 0.0
    %479 = vmatprep.subr.mxu0 0.0
    %480 = vmatpush1.msra.mxu0 0.0
    %481 = vmatprep.subr.mxu0 0.0
    %482 = vmatpush1.msra.mxu0 0.0
    %483 = vmatprep.subr.mxu0 0.0
    %484 = vmatpush1.msra.mxu0 0.0
    %485 = vmatprep.subr.mxu0 0.0
    %486 = vmatpush1.msra.mxu0 0.0
    %487 = vmatprep.subr.mxu0 0.0
    %488 = vmatpush1.msra.mxu0 0.0
    %489 = vmatprep.subr.mxu0 0.0
    %490 = vmatpush1.msra.mxu0 0.0
    %491 = vmatprep.subr.mxu0 0.0
    %492 = vmatpush1.msra.mxu0 0.0
    %493 = vmatprep.subr.mxu0 0.0
    %494 = vmatpush1.msra.mxu0 0.0
    %495 = vmatprep.subr.mxu0 0.0
    %496 = vmatpush1.msra.mxu0 0.0
    %497 = vmatprep.subr.mxu0 0.0
    %498 = vmatpush1.msra.mxu0 0.0
    %499 = vmatprep.subr.mxu0 0.0
    %500 = vmatpush1.msra.mxu0 0.0
    %501 = vmatprep.subr.mxu0 0.0
    %502 = vmatpush1.msra.mxu0 0.0
    %503 = vmatprep.subr.mxu0 0.0
    %504 = vmatpush1.msra.mxu0 0.0
    %505 = vmatprep.subr.mxu0 0.0
    %506 = vmatpush1.msra.mxu0 0.0
    %507 = vmatprep.mubr.f32.mxu0 0.0
    %508 = vmatmul.mubr.f32.gmra.mrb[0].mxu0 %v205
    %v509 = vpop.f32.mrb[0].mxu0
    %v510 = vadd.f32 %v425, %v509
    %v511 = vpop.f32.mrb[0].mxu0
    %512 = vmatprep.mubr.f32.mxu0 0.0
    %513 = vmatmul.mubr.f32.gmra.mrb[0].mxu0 %v210
    %v514 = vpop.f32.mrb[0].mxu0
    %v515 = vadd.f32 %v430, %v514
    %v516 = vpop.f32.mrb[0].mxu0
    %517 = vmatprep.mubr.f32.mxu0 0.0
    %518 = vmatmul.mubr.f32.gmra.mrb[0].mxu0 %v215
    %v519 = vpop.f32.mrb[0].mxu0
    %v520 = vadd.f32 %v435, %v519
    %v521 = vpop.f32.mrb[0].mxu0
    %522 = vmatprep.mubr.f32.mxu0 0.0
    %523 = vmatmul.mubr.f32.gmra.mrb[0].mxu0 %v220
    %v524 = vpop.f32.mrb[0].mxu0
    %v525 = vadd.f32 %v440, %v524
    %v526 = vpop.f32.mrb[0].mxu0
    %527 = vdwg.mxu0
    %s528 = scalar_lea.vmem [#allocation5], 64
    %v529 = vld [vmem:[%s528] sm:$0xff]
    %v530 = vld [vmem:[%s528 + $0x8] sm:$0xff]
    %v531 = vld [vmem:[%s528 + $0x10] sm:$0xff]
    %v532 = vld [vmem:[%s528 + $0x18] sm:$0xff]
    %v534 = vsel %vm125, %v529, 0
    %v537 = vsel %vm125, %v530, 0
    %v540 = vsel %vm125, %v531, 0
    %v543 = vsel %vm125, %v532, 0
    %545 = vmatprep.subr.mxu0 0.0
    %546 = vmatpush1.msra.mxu0 %v101
    %547 = vmatprep.subr.mxu0 0.0
    %548 = vmatpush1.msra.mxu0 %v102
    %549 = vmatprep.subr.mxu0 0.0
    %550 = vmatpush1.msra.mxu0 %v103
    %551 = vmatprep.subr.mxu0 0.0
    %552 = vmatpush1.msra.mxu0 %v104
    %553 = vmatprep.subr.mxu0 0.0
    %554 = vmatpush1.msra.mxu0 0.0
    %555 = vmatprep.subr.mxu0 0.0
    %556 = vmatpush1.msra.mxu0 0.0
    %557 = vmatprep.subr.mxu0 0.0
    %558 = vmatpush1.msra.mxu0 0.0
    %559 = vmatprep.subr.mxu0 0.0
    %560 = vmatpush1.msra.mxu0 0.0
    %561 = vmatprep.subr.mxu0 0.0
    %562 = vmatpush1.msra.mxu0 0.0
    %563 = vmatprep.subr.mxu0 0.0
    %564 = vmatpush1.msra.mxu0 0.0
    %565 = vmatprep.subr.mxu0 0.0
    %566 = vmatpush1.msra.mxu0 0.0
    %567 = vmatprep.subr.mxu0 0.0
    %568 = vmatpush1.msra.mxu0 0.0
    %569 = vmatprep.subr.mxu0 0.0
    %570 = vmatpush1.msra.mxu0 0.0
    %571 = vmatprep.subr.mxu0 0.0
    %572 = vmatpush1.msra.mxu0 0.0
    %573 = vmatprep.subr.mxu0 0.0
    %574 = vmatpush1.msra.mxu0 0.0
    %575 = vmatprep.subr.mxu0 0.0
    %576 = vmatpush1.msra.mxu0 0.0
    %577 = vmatprep.subr.mxu0 0.0
    %578 = vmatpush1.msra.mxu0 0.0
    %579 = vmatprep.subr.mxu0 0.0
    %580 = vmatpush1.msra.mxu0 0.0
    %581 = vmatprep.subr.mxu0 0.0
    %582 = vmatpush1.msra.mxu0 0.0
    %583 = vmatprep.subr.mxu0 0.0
    %584 = vmatpush1.msra.mxu0 0.0
    %585 = vmatprep.subr.mxu0 0.0
    %586 = vmatpush1.msra.mxu0 0.0
    %587 = vmatprep.subr.mxu0 0.0
    %588 = vmatpush1.msra.mxu0 0.0
    %589 = vmatprep.subr.mxu0 0.0
    %590 = vmatpush1.msra.mxu0 0.0
    %591 = vmatprep.subr.mxu0 0.0
    %592 = vmatpush1.msra.mxu0 0.0
    %593 = vmatprep.subr.mxu0 0.0
    %594 = vmatpush1.msra.mxu0 0.0
    %595 = vmatprep.subr.mxu0 0.0
    %596 = vmatpush1.msra.mxu0 0.0
    %597 = vmatprep.subr.mxu0 0.0
    %598 = vmatpush1.msra.mxu0 0.0
    %599 = vmatprep.subr.mxu0 0.0
    %600 = vmatpush1.msra.mxu0 0.0
    %601 = vmatprep.subr.mxu0 0.0
    %602 = vmatpush1.msra.mxu0 0.0
    %603 = vmatprep.subr.mxu0 0.0
    %604 = vmatpush1.msra.mxu0 0.0
    %605 = vmatprep.subr.mxu0 0.0
    %606 = vmatpush1.msra.mxu0 0.0
    %607 = vmatprep.subr.mxu0 0.0
    %608 = vmatpush1.msra.mxu0 0.0
    %609 = vmatprep.mubr.f32.mxu0 0.0
    %610 = vmatmul.mubr.f32.gmra.mrb[0].mxu0 %v534
    %v611 = vpop.f32.mrb[0].mxu0
    %v612 = vadd.f32 0.0, %v611
    %v613 = vpop.f32.mrb[0].mxu0
    %614 = vmatprep.mubr.f32.mxu0 0.0
    %615 = vmatmul.mubr.f32.gmra.mrb[0].mxu0 %v537
    %v616 = vpop.f32.mrb[0].mxu0
    %v617 = vadd.f32 0.0, %v616
    %v618 = vpop.f32.mrb[0].mxu0
    %619 = vmatprep.mubr.f32.mxu0 0.0
    %620 = vmatmul.mubr.f32.gmra.mrb[0].mxu0 %v540
    %v621 = vpop.f32.mrb[0].mxu0
    %v622 = vadd.f32 0.0, %v621
    %v623 = vpop.f32.mrb[0].mxu0
    %624 = vmatprep.mubr.f32.mxu0 0.0
    %625 = vmatmul.mubr.f32.gmra.mrb[0].mxu0 %v543
    %v626 = vpop.f32.mrb[0].mxu0
    %v627 = vadd.f32 0.0, %v626
    %v628 = vpop.f32.mrb[0].mxu0
    %629 = vdwg.mxu0
    %s630 = scalar_lea.vmem [#allocation7], 256
    %v631 = vld [vmem:[%s630] sm:$0xff]
    %v632 = vld [vmem:[%s630 + $0x8] sm:$0xff]
    %v633 = vld [vmem:[%s630 + $0x10] sm:$0xff]
    %v634 = vld [vmem:[%s630 + $0x18] sm:$0xff]
    %v635 = vld [vmem:[%s630 + $0x20] sm:$0xff]
    %v636 = vld [vmem:[%s630 + $0x28] sm:$0xff]
    %v637 = vld [vmem:[%s630 + $0x30] sm:$0xff]
    %v638 = vld [vmem:[%s630 + $0x38] sm:$0xff]
    %v639 = vld [vmem:[%s630 + $0x40] sm:$0xff]
    %v640 = vld [vmem:[%s630 + $0x48] sm:$0xff]
    %v641 = vld [vmem:[%s630 + $0x50] sm:$0xff]
    %v642 = vld [vmem:[%s630 + $0x58] sm:$0xff]
    %v643 = vld [vmem:[%s630 + $0x60] sm:$0xff]
    %v644 = vld [vmem:[%s630 + $0x68] sm:$0xff]
    %v645 = vld [vmem:[%s630 + $0x70] sm:$0xff]
    %v646 = vld [vmem:[%s630 + $0x78] sm:$0xff]
    %647 = vmatprep.subr.mxu0 0.0
    %648 = vmatpush1.msra.mxu0 %v631
    %649 = vmatprep.subr.mxu0 0.0
    %650 = vmatpush1.msra.mxu0 %v632
    %651 = vmatprep.subr.mxu0 0.0
    %652 = vmatpush1.msra.mxu0 %v633
    %653 = vmatprep.subr.mxu0 0.0
    %654 = vmatpush1.msra.mxu0 %v634
    %655 = vmatprep.subr.mxu0 0.0
    %656 = vmatpush1.msra.mxu0 %v635
    %657 = vmatprep.subr.mxu0 0.0
    %658 = vmatpush1.msra.mxu0 %v636
    %659 = vmatprep.subr.mxu0 0.0
    %660 = vmatpush1.msra.mxu0 %v637
    %661 = vmatprep.subr.mxu0 0.0
    %662 = vmatpush1.msra.mxu0 %v638
    %663 = vmatprep.subr.mxu0 0.0
    %664 = vmatpush1.msra.mxu0 %v639
    %665 = vmatprep.subr.mxu0 0.0
    %666 = vmatpush1.msra.mxu0 %v640
    %667 = vmatprep.subr.mxu0 0.0
    %668 = vmatpush1.msra.mxu0 %v641
    %669 = vmatprep.subr.mxu0 0.0
    %670 = vmatpush1.msra.mxu0 %v642
    %671 = vmatprep.subr.mxu0 0.0
    %672 = vmatpush1.msra.mxu0 %v643
    %673 = vmatprep.subr.mxu0 0.0
    %674 = vmatpush1.msra.mxu0 %v644
    %675 = vmatprep.subr.mxu0 0.0
    %676 = vmatpush1.msra.mxu0 %v645
    %677 = vmatprep.subr.mxu0 0.0
    %678 = vmatpush1.msra.mxu0 %v646
    %679 = vmatprep.subr.mxu0 0.0
    %680 = vmatpush1.msra.mxu0 0.0
    %681 = vmatprep.subr.mxu0 0.0
    %682 = vmatpush1.msra.mxu0 0.0
    %683 = vmatprep.subr.mxu0 0.0
    %684 = vmatpush1.msra.mxu0 0.0
    %685 = vmatprep.subr.mxu0 0.0
    %686 = vmatpush1.msra.mxu0 0.0
    %687 = vmatprep.subr.mxu0 0.0
    %688 = vmatpush1.msra.mxu0 0.0
    %689 = vmatprep.subr.mxu0 0.0
    %690 = vmatpush1.msra.mxu0 0.0
    %691 = vmatprep.subr.mxu0 0.0
    %692 = vmatpush1.msra.mxu0 0.0
    %693 = vmatprep.subr.mxu0 0.0
    %694 = vmatpush1.msra.mxu0 0.0
    %695 = vmatprep.subr.mxu0 0.0
    %696 = vmatpush1.msra.mxu0 0.0
    %697 = vmatprep.subr.mxu0 0.0
    %698 = vmatpush1.msra.mxu0 0.0
    %699 = vmatprep.subr.mxu0 0.0
    %700 = vmatpush1.msra.mxu0 0.0
    %701 = vmatprep.subr.mxu0 0.0
    %702 = vmatpush1.msra.mxu0 0.0
    %703 = vmatprep.subr.mxu0 0.0
    %704 = vmatpush1.msra.mxu0 0.0
    %705 = vmatprep.subr.mxu0 0.0
    %706 = vmatpush1.msra.mxu0 0.0
    %707 = vmatprep.subr.mxu0 0.0
    %708 = vmatpush1.msra.mxu0 0.0
    %709 = vmatprep.subr.mxu0 0.0
    %710 = vmatpush1.msra.mxu0 0.0
    %711 = vmatprep.mubr.f32.mxu0 0.0
    %712 = vmatmul.mubr.f32.gmra.mrb[0].mxu0 %v612
    %v713 = vpop.f32.mrb[0].mxu0
    %v714 = vadd.f32 0.0, %v713
    %v715 = vpop.f32.mrb[0].mxu0
    %716 = vmatprep.mubr.f32.mxu0 0.0
    %717 = vmatmul.mubr.f32.gmra.mrb[0].mxu0 %v617
    %v718 = vpop.f32.mrb[0].mxu0
    %v719 = vadd.f32 0.0, %v718
    %v720 = vpop.f32.mrb[0].mxu0
    %721 = vmatprep.mubr.f32.mxu0 0.0
    %722 = vmatmul.mubr.f32.gmra.mrb[0].mxu0 %v622
    %v723 = vpop.f32.mrb[0].mxu0
    %v724 = vadd.f32 0.0, %v723
    %v725 = vpop.f32.mrb[0].mxu0
    %726 = vmatprep.mubr.f32.mxu0 0.0
    %727 = vmatmul.mubr.f32.gmra.mrb[0].mxu0 %v627
    %v728 = vpop.f32.mrb[0].mxu0
    %v729 = vadd.f32 0.0, %v728
    %v730 = vpop.f32.mrb[0].mxu0
    %731 = vdwg.mxu0
    %v732 = vadd.f32 %v510, %v714
    %v733 = vadd.f32 %v515, %v719
    %v734 = vadd.f32 %v520, %v724
    %v735 = vadd.f32 %v525, %v729
    %v736 = vld [vmem:[%s5] sm:$0x1]
    %v737 = vld [vmem:[%s6] sm:$0x1]
    %v738 = vadd.f32 %v732, %v733
    %v739 = vadd.f32 %v738, %v734
    %v740 = vadd.f32 %v739, %v735
    %v741 = vrot.slane %v740, 4
    %v742 = vadd.f32 %v740, %v741
    %v743 = vrot.slane %v742, 2
    %v744 = vadd.f32 %v742, %v743
    %v745 = vrot.slane %v744, 1
    %v746 = vadd.f32 %v744, %v745
    %v747 = vmul.f32 %v732, %v732
    %v748 = vmul.f32 %v733, %v733
    %v749 = vmul.f32 %v734, %v734
    %v750 = vmul.f32 %v735, %v735
    %v751 = vadd.f32 %v747, %v748
    %v752 = vadd.f32 %v751, %v749
    %v753 = vadd.f32 %v752, %v750
    %v754 = vrot.slane %v753, 4
    %v755 = vadd.f32 %v753, %v754
    %v756 = vrot.slane %v755, 2
    %v757 = vadd.f32 %v755, %v756
    %v758 = vrot.slane %v757, 1
    %v759 = vadd.f32 %v757, %v758
    %760 = vmatprep.subr.mxu0 0.0
    %761 = vmatpush1.msra.mxu0 %v105
    %762 = vmatprep.subr.mxu0 0.0
    %763 = vmatpush1.msra.mxu0 %v106
    %764 = vmatprep.subr.mxu0 0.0
    %765 = vmatpush1.msra.mxu0 %v107
    %766 = vmatprep.subr.mxu0 0.0
    %767 = vmatpush1.msra.mxu0 %v108
    %768 = vmatprep.subr.mxu0 0.0
    %769 = vmatpush1.msra.mxu0 %v109
    %770 = vmatprep.subr.mxu0 0.0
    %771 = vmatpush1.msra.mxu0 %v110
    %772 = vmatprep.subr.mxu0 0.0
    %773 = vmatpush1.msra.mxu0 %v111
    %774 = vmatprep.subr.mxu0 0.0
    %775 = vmatpush1.msra.mxu0 %v112
    %776 = vmatprep.subr.mxu0 0.0
    %777 = vmatpush1.msra.mxu0 %v113
    %778 = vmatprep.subr.mxu0 0.0
    %779 = vmatpush1.msra.mxu0 %v114
    %780 = vmatprep.subr.mxu0 0.0
    %781 = vmatpush1.msra.mxu0 %v115
    %782 = vmatprep.subr.mxu0 0.0
    %783 = vmatpush1.msra.mxu0 %v116
    %784 = vmatprep.subr.mxu0 0.0
    %785 = vmatpush1.msra.mxu0 %v117
    %786 = vmatprep.subr.mxu0 0.0
    %787 = vmatpush1.msra.mxu0 %v118
    %788 = vmatprep.subr.mxu0 0.0
    %789 = vmatpush1.msra.mxu0 %v119
    %790 = vmatprep.subr.mxu0 0.0
    %791 = vmatpush1.msra.mxu0 %v120
    %792 = vmatprep.subr.mxu0 0.0
    %793 = vmatpush1.msra.mxu0 0.0
    %794 = vmatprep.subr.mxu0 0.0
    %795 = vmatpush1.msra.mxu0 0.0
    %796 = vmatprep.subr.mxu0 0.0
    %797 = vmatpush1.msra.mxu0 0.0
    %798 = vmatprep.subr.mxu0 0.0
    %799 = vmatpush1.msra.mxu0 0.0
    %800 = vmatprep.subr.mxu0 0.0
    %801 = vmatpush1.msra.mxu0 0.0
    %802 = vmatprep.subr.mxu0 0.0
    %803 = vmatpush1.msra.mxu0 0.0
    %804 = vmatprep.subr.mxu0 0.0
    %805 = vmatpush1.msra.mxu0 0.0
    %806 = vmatprep.subr.mxu0 0.0
    %807 = vmatpush1.msra.mxu0 0.0
    %808 = vmatprep.subr.mxu0 0.0
    %809 = vmatpush1.msra.mxu0 0.0
    %810 = vmatprep.subr.mxu0 0.0
    %811 = vmatpush1.msra.mxu0 0.0
    %812 = vmatprep.subr.mxu0 0.0
    %813 = vmatpush1.msra.mxu0 0.0
    %814 = vmatprep.subr.mxu0 0.0
    %815 = vmatpush1.msra.mxu0 0.0
    %816 = vmatprep.subr.mxu0 0.0
    %817 = vmatpush1.msra.mxu0 0.0
    %818 = vmatprep.subr.mxu0 0.0
    %819 = vmatpush1.msra.mxu0 0.0
    %820 = vmatprep.subr.mxu0 0.0
    %821 = vmatpush1.msra.mxu0 0.0
    %822 = vmatprep.subr.mxu0 0.0
    %823 = vmatpush1.msra.mxu0 0.0
    %824 = vmatprep.mubr.f32.mxu0 0.0
    %825 = vmatmul.mubr.f32.gmra.mrb[0].mxu0 %v746
    %v826 = vpop.f32.mrb[0].mxu0
    %v827 = vadd.f32 0.0, %v826
    %v828 = vpop.f32.mrb[0].mxu0
    %829 = vdwg.mxu0
    %830 = vmatprep.subr.mxu0 0.0
    %831 = vmatpush1.msra.mxu0 %v105
    %832 = vmatprep.subr.mxu0 0.0
    %833 = vmatpush1.msra.mxu0 %v106
    %834 = vmatprep.subr.mxu0 0.0
    %835 = vmatpush1.msra.mxu0 %v107
    %836 = vmatprep.subr.mxu0 0.0
    %837 = vmatpush1.msra.mxu0 %v108
    %838 = vmatprep.subr.mxu0 0.0
    %839 = vmatpush1.msra.mxu0 %v109
    %840 = vmatprep.subr.mxu0 0.0
    %841 = vmatpush1.msra.mxu0 %v110
    %842 = vmatprep.subr.mxu0 0.0
    %843 = vmatpush1.msra.mxu0 %v111
    %844 = vmatprep.subr.mxu0 0.0
    %845 = vmatpush1.msra.mxu0 %v112
    %846 = vmatprep.subr.mxu0 0.0
    %847 = vmatpush1.msra.mxu0 %v113
    %848 = vmatprep.subr.mxu0 0.0
    %849 = vmatpush1.msra.mxu0 %v114
    %850 = vmatprep.subr.mxu0 0.0
    %851 = vmatpush1.msra.mxu0 %v115
    %852 = vmatprep.subr.mxu0 0.0
    %853 = vmatpush1.msra.mxu0 %v116
    %854 = vmatprep.subr.mxu0 0.0
    %855 = vmatpush1.msra.mxu0 %v117
    %856 = vmatprep.subr.mxu0 0.0
    %857 = vmatpush1.msra.mxu0 %v118
    %858 = vmatprep.subr.mxu0 0.0
    %859 = vmatpush1.msra.mxu0 %v119
    %860 = vmatprep.subr.mxu0 0.0
    %861 = vmatpush1.msra.mxu0 %v120
    %862 = vmatprep.subr.mxu0 0.0
    %863 = vmatpush1.msra.mxu0 0.0
    %864 = vmatprep.subr.mxu0 0.0
    %865 = vmatpush1.msra.mxu0 0.0
    %866 = vmatprep.subr.mxu0 0.0
    %867 = vmatpush1.msra.mxu0 0.0
    %868 = vmatprep.subr.mxu0 0.0
    %869 = vmatpush1.msra.mxu0 0.0
    %870 = vmatprep.subr.mxu0 0.0
    %871 = vmatpush1.msra.mxu0 0.0
    %872 = vmatprep.subr.mxu0 0.0
    %873 = vmatpush1.msra.mxu0 0.0
    %874 = vmatprep.subr.mxu0 0.0
    %875 = vmatpush1.msra.mxu0 0.0
    %876 = vmatprep.subr.mxu0 0.0
    %877 = vmatpush1.msra.mxu0 0.0
    %878 = vmatprep.subr.mxu0 0.0
    %879 = vmatpush1.msra.mxu0 0.0
    %880 = vmatprep.subr.mxu0 0.0
    %881 = vmatpush1.msra.mxu0 0.0
    %882 = vmatprep.subr.mxu0 0.0
    %883 = vmatpush1.msra.mxu0 0.0
    %884 = vmatprep.subr.mxu0 0.0
    %885 = vmatpush1.msra.mxu0 0.0
    %886 = vmatprep.subr.mxu0 0.0
    %887 = vmatpush1.msra.mxu0 0.0
    %888 = vmatprep.subr.mxu0 0.0
    %889 = vmatpush1.msra.mxu0 0.0
    %890 = vmatprep.subr.mxu0 0.0
    %891 = vmatpush1.msra.mxu0 0.0
    %892 = vmatprep.subr.mxu0 0.0
    %893 = vmatpush1.msra.mxu0 0.0
    %894 = vmatprep.mubr.f32.mxu0 0.0
    %895 = vmatmul.mubr.f32.gmra.mrb[0].mxu0 %v759
    %v896 = vpop.f32.mrb[0].mxu0
    %v897 = vadd.f32 0.0, %v896
    %v898 = vpop.f32.mrb[0].mxu0
    %899 = vdwg.mxu0
    %v900 = vmul.f32 %v827, %v827
    %v901 = vsub.f32 %v897, %v900
    %v902 = vadd.f32 %v901, 1e-05
    %v903 = vrsqrt.pop %v902
    %v904 = vmul.f32 %v736, %v903
    %v906 = vlaneseq
    %v907 = vshrl.u32 %v906, 7
    %v908 = vsub.s32 0, %v907
    %v909 = vrot.slane %v904, %v908
    %v911 = vmul.f32 %v732, %v909
    %v912 = vmul.f32 %v733, %v909
    %v913 = vmul.f32 %v734, %v909
    %v914 = vmul.f32 %v735, %v909
    %v915 = vmul.f32 %v827, %v904
    %v916 = vsub.f32 %v737, %v915
    %v918 = vlaneseq
    %v919 = vshrl.u32 %v918, 7
    %v920 = vsub.s32 0, %v919
    %v921 = vrot.slane %v916, %v920
    %v923 = vadd.f32 %v911, %v921
    %v924 = vadd.f32 %v912, %v921
    %v925 = vadd.f32 %v913, %v921
    %v926 = vadd.f32 %v914, %v921
    %v927 = vmax.f32 %v923, 0.0
    %v928 = vmax.f32 %v924, 0.0
    %v929 = vmax.f32 %v925, 0.0
    %v930 = vmax.f32 %v926, 0.0
    %931 = vmatprep.subr.mxu0 0.0
    %932 = vmatpush1.msra.mxu0 %v927
    %933 = vmatprep.subr.mxu0 0.0
    %934 = vmatpush1.msra.mxu0 %v928
    %935 = vmatprep.subr.mxu0 0.0
    %936 = vmatpush1.msra.mxu0 %v929
    %937 = vmatprep.subr.mxu0 0.0
    %938 = vmatpush1.msra.mxu0 %v930
    %939 = vmatprep.subr.mxu0 0.0
    %940 = vmatpush1.msra.mxu0 0.0
    %941 = vmatprep.subr.mxu0 0.0
    %942 = vmatpush1.msra.mxu0 0.0
    %943 = vmatprep.subr.mxu0 0.0
    %944 = vmatpush1.msra.mxu0 0.0
    %945 = vmatprep.subr.mxu0 0.0
    %946 = vmatpush1.msra.mxu0 0.0
    %947 = vmatprep.subr.mxu0 0.0
    %948 = vmatpush1.msra.mxu0 0.0
    %949 = vmatprep.subr.mxu0 0.0
    %950 = vmatpush1.msra.mxu0 0.0
    %951 = vmatprep.subr.mxu0 0.0
    %952 = vmatpush1.msra.mxu0 0.0
    %953 = vmatprep.subr.mxu0 0.0
    %954 = vmatpush1.msra.mxu0 0.0
    %955 = vmatprep.subr.mxu0 0.0
    %956 = vmatpush1.msra.mxu0 0.0
    %957 = vmatprep.subr.mxu0 0.0
    %958 = vmatpush1.msra.mxu0 0.0
    %959 = vmatprep.subr.mxu0 0.0
    %960 = vmatpush1.msra.mxu0 0.0
    %961 = vmatprep.subr.mxu0 0.0
    %962 = vmatpush1.msra.mxu0 0.0
    %963 = vmatprep.subr.mxu0 0.0
    %964 = vmatpush1.msra.mxu0 0.0
    %965 = vmatprep.subr.mxu0 0.0
    %966 = vmatpush1.msra.mxu0 0.0
    %967 = vmatprep.subr.mxu0 0.0
    %968 = vmatpush1.msra.mxu0 0.0
    %969 = vmatprep.subr.mxu0 0.0
    %970 = vmatpush1.msra.mxu0 0.0
    %971 = vmatprep.subr.mxu0 0.0
    %972 = vmatpush1.msra.mxu0 0.0
    %973 = vmatprep.subr.mxu0 0.0
    %974 = vmatpush1.msra.mxu0 0.0
    %975 = vmatprep.subr.mxu0 0.0
    %976 = vmatpush1.msra.mxu0 0.0
    %977 = vmatprep.subr.mxu0 0.0
    %978 = vmatpush1.msra.mxu0 0.0
    %979 = vmatprep.subr.mxu0 0.0
    %980 = vmatpush1.msra.mxu0 0.0
    %981 = vmatprep.subr.mxu0 0.0
    %982 = vmatpush1.msra.mxu0 0.0
    %983 = vmatprep.subr.mxu0 0.0
    %984 = vmatpush1.msra.mxu0 0.0
    %985 = vmatprep.subr.mxu0 0.0
    %986 = vmatpush1.msra.mxu0 0.0
    %987 = vmatprep.subr.mxu0 0.0
    %988 = vmatpush1.msra.mxu0 0.0
    %989 = vmatprep.subr.mxu0 0.0
    %990 = vmatpush1.msra.mxu0 0.0
    %991 = vmatprep.subr.mxu0 0.0
    %992 = vmatpush1.msra.mxu0 0.0
    %993 = vmatprep.subr.mxu0 0.0
    %994 = vmatpush1.msra.mxu0 0.0
    %995 = vmatprep.mubr.f32.mxu0 0.0
    %996 = vmatmul.mubr.f32.gmra.mrb[0].mxu0 %v127
    %v997 = vpop.f32.mrb[0].mxu0
    %v998 = vadd.f32 0.0, %v997
    %v999 = vpop.f32.mrb[0].mxu0
    %1000 = vmatprep.mubr.f32.mxu0 0.0
    %1001 = vmatmul.mubr.f32.gmra.mrb[0].mxu0 %v130
    %v1002 = vpop.f32.mrb[0].mxu0
    %v1003 = vadd.f32 0.0, %v1002
    %v1004 = vpop.f32.mrb[0].mxu0
    %1005 = vmatprep.mubr.f32.mxu0 0.0
    %1006 = vmatmul.mubr.f32.gmra.mrb[0].mxu0 %v133
    %v1007 = vpop.f32.mrb[0].mxu0
    %v1008 = vadd.f32 0.0, %v1007
    %v1009 = vpop.f32.mrb[0].mxu0
    %1010 = vmatprep.mubr.f32.mxu0 0.0
    %1011 = vmatmul.mubr.f32.gmra.mrb[0].mxu0 %v136
    %v1012 = vpop.f32.mrb[0].mxu0
    %v1013 = vadd.f32 0.0, %v1012
    %v1014 = vpop.f32.mrb[0].mxu0
    %1015 = vdwg.mxu0
    %v1016 = vld [vmem:[#allocation8] sm:$0xff]
    %v1017 = vld [vmem:[#allocation8 + $0x8] sm:$0xff]
    %v1018 = vld [vmem:[#allocation8 + $0x10] sm:$0xff]
    %v1019 = vld [vmem:[#allocation8 + $0x18] sm:$0xff]
    %v1020 = vld [vmem:[#allocation8 + $0x20] sm:$0xff]
    %v1021 = vld [vmem:[#allocation8 + $0x28] sm:$0xff]
    %v1022 = vld [vmem:[#allocation8 + $0x30] sm:$0xff]
    %v1023 = vld [vmem:[#allocation8 + $0x38] sm:$0xff]
    %v1024 = vld [vmem:[#allocation8 + $0x40] sm:$0xff]
    %v1025 = vld [vmem:[#allocation8 + $0x48] sm:$0xff]
    %v1026 = vld [vmem:[#allocation8 + $0x50] sm:$0xff]
    %v1027 = vld [vmem:[#allocation8 + $0x58] sm:$0xff]
    %v1028 = vld [vmem:[#allocation8 + $0x60] sm:$0xff]
    %v1029 = vld [vmem:[#allocation8 + $0x68] sm:$0xff]
    %v1030 = vld [vmem:[#allocation8 + $0x70] sm:$0xff]
    %v1031 = vld [vmem:[#allocation8 + $0x78] sm:$0xff]
    %1032 = vmatprep.subr.mxu0 0.0
    %1033 = vmatpush1.msra.mxu0 %v927
    %1034 = vmatprep.subr.mxu0 0.0
    %1035 = vmatpush1.msra.mxu0 %v928
    %1036 = vmatprep.subr.mxu0 0.0
    %1037 = vmatpush1.msra.mxu0 %v929
    %1038 = vmatprep.subr.mxu0 0.0
    %1039 = vmatpush1.msra.mxu0 %v930
    %1040 = vmatprep.subr.mxu0 0.0
    %1041 = vmatpush1.msra.mxu0 0.0
    %1042 = vmatprep.subr.mxu0 0.0
    %1043 = vmatpush1.msra.mxu0 0.0
    %1044 = vmatprep.subr.mxu0 0.0
    %1045 = vmatpush1.msra.mxu0 0.0
    %1046 = vmatprep.subr.mxu0 0.0
    %1047 = vmatpush1.msra.mxu0 0.0
    %1048 = vmatprep.subr.mxu0 0.0
    %1049 = vmatpush1.msra.mxu0 0.0
    %1050 = vmatprep.subr.mxu0 0.0
    %1051 = vmatpush1.msra.mxu0 0.0
    %1052 = vmatprep.subr.mxu0 0.0
    %1053 = vmatpush1.msra.mxu0 0.0
    %1054 = vmatprep.subr.mxu0 0.0
    %1055 = vmatpush1.msra.mxu0 0.0
    %1056 = vmatprep.subr.mxu0 0.0
    %1057 = vmatpush1.msra.mxu0 0.0
    %1058 = vmatprep.subr.mxu0 0.0
    %1059 = vmatpush1.msra.mxu0 0.0
    %1060 = vmatprep.subr.mxu0 0.0
    %1061 = vmatpush1.msra.mxu0 0.0
    %1062 = vmatprep.subr.mxu0 0.0
    %1063 = vmatpush1.msra.mxu0 0.0
    %1064 = vmatprep.subr.mxu0 0.0
    %1065 = vmatpush1.msra.mxu0 0.0
    %1066 = vmatprep.subr.mxu0 0.0
    %1067 = vmatpush1.msra.mxu0 0.0
    %1068 = vmatprep.subr.mxu0 0.0
    %1069 = vmatpush1.msra.mxu0 0.0
    %1070 = vmatprep.subr.mxu0 0.0
    %1071 = vmatpush1.msra.mxu0 0.0
    %1072 = vmatprep.subr.mxu0 0.0
    %1073 = vmatpush1.msra.mxu0 0.0
    %1074 = vmatprep.subr.mxu0 0.0
    %1075 = vmatpush1.msra.mxu0 0.0
    %1076 = vmatprep.subr.mxu0 0.0
    %1077 = vmatpush1.msra.mxu0 0.0
    %1078 = vmatprep.subr.mxu0 0.0
    %1079 = vmatpush1.msra.mxu0 0.0
    %1080 = vmatprep.subr.mxu0 0.0
    %1081 = vmatpush1.msra.mxu0 0.0
    %1082 = vmatprep.subr.mxu0 0.0
    %1083 = vmatpush1.msra.mxu0 0.0
    %1084 = vmatprep.subr.mxu0 0.0
    %1085 = vmatpush1.msra.mxu0 0.0
    %1086 = vmatprep.subr.mxu0 0.0
    %1087 = vmatpush1.msra.mxu0 0.0
    %1088 = vmatprep.subr.mxu0 0.0
    %1089 = vmatpush1.msra.mxu0 0.0
    %1090 = vmatprep.subr.mxu0 0.0
    %1091 = vmatpush1.msra.mxu0 0.0
    %1092 = vmatprep.subr.mxu0 0.0
    %1093 = vmatpush1.msra.mxu0 0.0
    %1094 = vmatprep.subr.mxu0 0.0
    %1095 = vmatpush1.msra.mxu0 0.0
    %1096 = vmatprep.mubr.f32.mxu0 0.0
    %1097 = vmatmul.mubr.f32.gmra.mrb[0].mxu0 %v245
    %v1098 = vpop.f32.mrb[0].mxu0
    %v1099 = vadd.f32 0.0, %v1098
    %v1100 = vpop.f32.mrb[0].mxu0
    %1101 = vmatprep.mubr.f32.mxu0 0.0
    %1102 = vmatmul.mubr.f32.gmra.mrb[0].mxu0 %v248
    %v1103 = vpop.f32.mrb[0].mxu0
    %v1104 = vadd.f32 0.0, %v1103
    %v1105 = vpop.f32.mrb[0].mxu0
    %1106 = vmatprep.mubr.f32.mxu0 0.0
    %1107 = vmatmul.mubr.f32.gmra.mrb[0].mxu0 %v251
    %v1108 = vpop.f32.mrb[0].mxu0
    %v1109 = vadd.f32 0.0, %v1108
    %v1110 = vpop.f32.mrb[0].mxu0
    %1111 = vmatprep.mubr.f32.mxu0 0.0
    %1112 = vmatmul.mubr.f32.gmra.mrb[0].mxu0 %v254
    %v1113 = vpop.f32.mrb[0].mxu0
    %v1114 = vadd.f32 0.0, %v1113
    %v1115 = vpop.f32.mrb[0].mxu0
    %1116 = vdwg.mxu0
    %s1117 = scalar_lea.vmem [#allocation8], 128
    %v1118 = vld [vmem:[%s1117] sm:$0xff]
    %v1119 = vld [vmem:[%s1117 + $0x8] sm:$0xff]
    %v1120 = vld [vmem:[%s1117 + $0x10] sm:$0xff]
    %v1121 = vld [vmem:[%s1117 + $0x18] sm:$0xff]
    %v1122 = vld [vmem:[%s1117 + $0x20] sm:$0xff]
    %v1123 = vld [vmem:[%s1117 + $0x28] sm:$0xff]
    %v1124 = vld [vmem:[%s1117 + $0x30] sm:$0xff]
    %v1125 = vld [vmem:[%s1117 + $0x38] sm:$0xff]
    %v1126 = vld [vmem:[%s1117 + $0x40] sm:$0xff]
    %v1127 = vld [vmem:[%s1117 + $0x48] sm:$0xff]
    %v1128 = vld [vmem:[%s1117 + $0x50] sm:$0xff]
    %v1129 = vld [vmem:[%s1117 + $0x58] sm:$0xff]
    %v1130 = vld [vmem:[%s1117 + $0x60] sm:$0xff]
    %v1131 = vld [vmem:[%s1117 + $0x68] sm:$0xff]
    %v1132 = vld [vmem:[%s1117 + $0x70] sm:$0xff]
    %v1133 = vld [vmem:[%s1117 + $0x78] sm:$0xff]
    %1134 = vmatprep.subr.mxu0 0.0
    %1135 = vmatpush1.msra.mxu0 %v1118
    %1136 = vmatprep.subr.mxu0 0.0
    %1137 = vmatpush1.msra.mxu0 %v1119
    %1138 = vmatprep.subr.mxu0 0.0
    %1139 = vmatpush1.msra.mxu0 %v1120
    %1140 = vmatprep.subr.mxu0 0.0
    %1141 = vmatpush1.msra.mxu0 %v1121
    %1142 = vmatprep.subr.mxu0 0.0
    %1143 = vmatpush1.msra.mxu0 %v1122
    %1144 = vmatprep.subr.mxu0 0.0
    %1145 = vmatpush1.msra.mxu0 %v1123
    %1146 = vmatprep.subr.mxu0 0.0
    %1147 = vmatpush1.msra.mxu0 %v1124
    %1148 = vmatprep.subr.mxu0 0.0
    %1149 = vmatpush1.msra.mxu0 %v1125
    %1150 = vmatprep.subr.mxu0 0.0
    %1151 = vmatpush1.msra.mxu0 %v1126
    %1152 = vmatprep.subr.mxu0 0.0
    %1153 = vmatpush1.msra.mxu0 %v1127
    %1154 = vmatprep.subr.mxu0 0.0
    %1155 = vmatpush1.msra.mxu0 %v1128
    %1156 = vmatprep.subr.mxu0 0.0
    %1157 = vmatpush1.msra.mxu0 %v1129
    %1158 = vmatprep.subr.mxu0 0.0
    %1159 = vmatpush1.msra.mxu0 %v1130
    %1160 = vmatprep.subr.mxu0 0.0
    %1161 = vmatpush1.msra.mxu0 %v1131
    %1162 = vmatprep.subr.mxu0 0.0
    %1163 = vmatpush1.msra.mxu0 %v1132
    %1164 = vmatprep.subr.mxu0 0.0
    %1165 = vmatpush1.msra.mxu0 %v1133
    %1166 = vmatprep.subr.mxu0 0.0
    %1167 = vmatpush1.msra.mxu0 0.0
    %1168 = vmatprep.subr.mxu0 0.0
    %1169 = vmatpush1.msra.mxu0 0.0
    %1170 = vmatprep.subr.mxu0 0.0
    %1171 = vmatpush1.msra.mxu0 0.0
    %1172 = vmatprep.subr.mxu0 0.0
    %1173 = vmatpush1.msra.mxu0 0.0
    %1174 = vmatprep.subr.mxu0 0.0
    %1175 = vmatpush1.msra.mxu0 0.0
    %1176 = vmatprep.subr.mxu0 0.0
    %1177 = vmatpush1.msra.mxu0 0.0
    %1178 = vmatprep.subr.mxu0 0.0
    %1179 = vmatpush1.msra.mxu0 0.0
    %1180 = vmatprep.subr.mxu0 0.0
    %1181 = vmatpush1.msra.mxu0 0.0
    %1182 = vmatprep.subr.mxu0 0.0
    %1183 = vmatpush1.msra.mxu0 0.0
    %1184 = vmatprep.subr.mxu0 0.0
    %1185 = vmatpush1.msra.mxu0 0.0
    %1186 = vmatprep.subr.mxu0 0.0
    %1187 = vmatpush1.msra.mxu0 0.0
    %1188 = vmatprep.subr.mxu0 0.0
    %1189 = vmatpush1.msra.mxu0 0.0
    %1190 = vmatprep.subr.mxu0 0.0
    %1191 = vmatpush1.msra.mxu0 0.0
    %1192 = vmatprep.subr.mxu0 0.0
    %1193 = vmatpush1.msra.mxu0 0.0
    %1194 = vmatprep.subr.mxu0 0.0
    %1195 = vmatpush1.msra.mxu0 0.0
    %1196 = vmatprep.subr.mxu0 0.0
    %1197 = vmatpush1.msra.mxu0 0.0
    %1198 = vmatprep.mubr.f32.mxu0 0.0
    %1199 = vmatmul.mubr.f32.gmra.mrb[0].mxu0 %v1099
    %v1200 = vpop.f32.mrb[0].mxu0
    %v1201 = vadd.f32 0.0, %v1200
    %v1202 = vpop.f32.mrb[0].mxu0
    %1203 = vmatprep.mubr.f32.mxu0 0.0
    %1204 = vmatmul.mubr.f32.gmra.mrb[0].mxu0 %v1104
    %v1205 = vpop.f32.mrb[0].mxu0
    %v1206 = vadd.f32 0.0, %v1205
    %v1207 = vpop.f32.mrb[0].mxu0
    %1208 = vmatprep.mubr.f32.mxu0 0.0
    %1209 = vmatmul.mubr.f32.gmra.mrb[0].mxu0 %v1109
    %v1210 = vpop.f32.mrb[0].mxu0
    %v1211 = vadd.f32 0.0, %v1210
    %v1212 = vpop.f32.mrb[0].mxu0
    %1213 = vmatprep.mubr.f32.mxu0 0.0
    %1214 = vmatmul.mubr.f32.gmra.mrb[0].mxu0 %v1114
    %v1215 = vpop.f32.mrb[0].mxu0
    %v1216 = vadd.f32 0.0, %v1215
    %v1217 = vpop.f32.mrb[0].mxu0
    %1218 = vdwg.mxu0
    %1219 = vmatprep.subr.mxu0 0.0
    %1220 = vmatpush1.msra.mxu0 %v1016
    %1221 = vmatprep.subr.mxu0 0.0
    %1222 = vmatpush1.msra.mxu0 %v1017
    %1223 = vmatprep.subr.mxu0 0.0
    %1224 = vmatpush1.msra.mxu0 %v1018
    %1225 = vmatprep.subr.mxu0 0.0
    %1226 = vmatpush1.msra.mxu0 %v1019
    %1227 = vmatprep.subr.mxu0 0.0
    %1228 = vmatpush1.msra.mxu0 %v1020
    %1229 = vmatprep.subr.mxu0 0.0
    %1230 = vmatpush1.msra.mxu0 %v1021
    %1231 = vmatprep.subr.mxu0 0.0
    %1232 = vmatpush1.msra.mxu0 %v1022
    %1233 = vmatprep.subr.mxu0 0.0
    %1234 = vmatpush1.msra.mxu0 %v1023
    %1235 = vmatprep.subr.mxu0 0.0
    %1236 = vmatpush1.msra.mxu0 %v1024
    %1237 = vmatprep.subr.mxu0 0.0
    %1238 = vmatpush1.msra.mxu0 %v1025
    %1239 = vmatprep.subr.mxu0 0.0
    %1240 = vmatpush1.msra.mxu0 %v1026
    %1241 = vmatprep.subr.mxu0 0.0
    %1242 = vmatpush1.msra.mxu0 %v1027
    %1243 = vmatprep.subr.mxu0 0.0
    %1244 = vmatpush1.msra.mxu0 %v1028
    %1245 = vmatprep.subr.mxu0 0.0
    %1246 = vmatpush1.msra.mxu0 %v1029
    %1247 = vmatprep.subr.mxu0 0.0
    %1248 = vmatpush1.msra.mxu0 %v1030
    %1249 = vmatprep.subr.mxu0 0.0
    %1250 = vmatpush1.msra.mxu0 %v1031
    %1251 = vmatprep.subr.mxu0 0.0
    %1252 = vmatpush1.msra.mxu0 0.0
    %1253 = vmatprep.subr.mxu0 0.0
    %1254 = vmatpush1.msra.mxu0 0.0
    %1255 = vmatprep.subr.mxu0 0.0
    %1256 = vmatpush1.msra.mxu0 0.0
    %1257 = vmatprep.subr.mxu0 0.0
    %1258 = vmatpush1.msra.mxu0 0.0
    %1259 = vmatprep.subr.mxu0 0.0
    %1260 = vmatpush1.msra.mxu0 0.0
    %1261 = vmatprep.subr.mxu0 0.0
    %1262 = vmatpush1.msra.mxu0 0.0
    %1263 = vmatprep.subr.mxu0 0.0
    %1264 = vmatpush1.msra.mxu0 0.0
    %1265 = vmatprep.subr.mxu0 0.0
    %1266 = vmatpush1.msra.mxu0 0.0
    %1267 = vmatprep.subr.mxu0 0.0
    %1268 = vmatpush1.msra.mxu0 0.0
    %1269 = vmatprep.subr.mxu0 0.0
    %1270 = vmatpush1.msra.mxu0 0.0
    %1271 = vmatprep.subr.mxu0 0.0
    %1272 = vmatpush1.msra.mxu0 0.0
    %1273 = vmatprep.subr.mxu0 0.0
    %1274 = vmatpush1.msra.mxu0 0.0
    %1275 = vmatprep.subr.mxu0 0.0
    %1276 = vmatpush1.msra.mxu0 0.0
    %1277 = vmatprep.subr.mxu0 0.0
    %1278 = vmatpush1.msra.mxu0 0.0
    %1279 = vmatprep.subr.mxu0 0.0
    %1280 = vmatpush1.msra.mxu0 0.0
    %1281 = vmatprep.subr.mxu0 0.0
    %1282 = vmatpush1.msra.mxu0 0.0
    %1283 = vmatprep.mubr.f32.mxu0 0.0
    %1284 = vmatmul.mubr.f32.gmra.mrb[0].mxu0 %v998
    %v1285 = vpop.f32.mrb[0].mxu0
    %v1286 = vadd.f32 %v1201, %v1285
    %v1287 = vpop.f32.mrb[0].mxu0
    %1288 = vmatprep.mubr.f32.mxu0 0.0
    %1289 = vmatmul.mubr.f32.gmra.mrb[0].mxu0 %v1003
    %v1290 = vpop.f32.mrb[0].mxu0
    %v1291 = vadd.f32 %v1206, %v1290
    %v1292 = vpop.f32.mrb[0].mxu0
    %1293 = vmatprep.mubr.f32.mxu0 0.0
    %1294 = vmatmul.mubr.f32.gmra.mrb[0].mxu0 %v1008
    %v1295 = vpop.f32.mrb[0].mxu0
    %v1296 = vadd.f32 %v1211, %v1295
    %v1297 = vpop.f32.mrb[0].mxu0
    %1298 = vmatprep.mubr.f32.mxu0 0.0
    %1299 = vmatmul.mubr.f32.gmra.mrb[0].mxu0 %v1013
    %v1300 = vpop.f32.mrb[0].mxu0
    %v1301 = vadd.f32 %v1216, %v1300
    %v1302 = vpop.f32.mrb[0].mxu0
    %1303 = vdwg.mxu0
    %1304 = vmatprep.subr.mxu0 0.0
    %1305 = vmatpush1.msra.mxu0 %v927
    %1306 = vmatprep.subr.mxu0 0.0
    %1307 = vmatpush1.msra.mxu0 %v928
    %1308 = vmatprep.subr.mxu0 0.0
    %1309 = vmatpush1.msra.mxu0 %v929
    %1310 = vmatprep.subr.mxu0 0.0
    %1311 = vmatpush1.msra.mxu0 %v930
    %1312 = vmatprep.subr.mxu0 0.0
    %1313 = vmatpush1.msra.mxu0 0.0
    %1314 = vmatprep.subr.mxu0 0.0
    %1315 = vmatpush1.msra.mxu0 0.0
    %1316 = vmatprep.subr.mxu0 0.0
    %1317 = vmatpush1.msra.mxu0 0.0
    %1318 = vmatprep.subr.mxu0 0.0
    %1319 = vmatpush1.msra.mxu0 0.0
    %1320 = vmatprep.subr.mxu0 0.0
    %1321 = vmatpush1.msra.mxu0 0.0
    %1322 = vmatprep.subr.mxu0 0.0
    %1323 = vmatpush1.msra.mxu0 0.0
    %1324 = vmatprep.subr.mxu0 0.0
    %1325 = vmatpush1.msra.mxu0 0.0
    %1326 = vmatprep.subr.mxu0 0.0
    %1327 = vmatpush1.msra.mxu0 0.0
    %1328 = vmatprep.subr.mxu0 0.0
    %1329 = vmatpush1.msra.mxu0 0.0
    %1330 = vmatprep.subr.mxu0 0.0
    %1331 = vmatpush1.msra.mxu0 0.0
    %1332 = vmatprep.subr.mxu0 0.0
    %1333 = vmatpush1.msra.mxu0 0.0
    %1334 = vmatprep.subr.mxu0 0.0
    %1335 = vmatpush1.msra.mxu0 0.0
    %1336 = vmatprep.subr.mxu0 0.0
    %1337 = vmatpush1.msra.mxu0 0.0
    %1338 = vmatprep.subr.mxu0 0.0
    %1339 = vmatpush1.msra.mxu0 0.0
    %1340 = vmatprep.subr.mxu0 0.0
    %1341 = vmatpush1.msra.mxu0 0.0
    %1342 = vmatprep.subr.mxu0 0.0
    %1343 = vmatpush1.msra.mxu0 0.0
    %1344 = vmatprep.subr.mxu0 0.0
    %1345 = vmatpush1.msra.mxu0 0.0
    %1346 = vmatprep.subr.mxu0 0.0
    %1347 = vmatpush1.msra.mxu0 0.0
    %1348 = vmatprep.subr.mxu0 0.0
    %1349 = vmatpush1.msra.mxu0 0.0
    %1350 = vmatprep.subr.mxu0 0.0
    %1351 = vmatpush1.msra.mxu0 0.0
    %1352 = vmatprep.subr.mxu0 0.0
    %1353 = vmatpush1.msra.mxu0 0.0
    %1354 = vmatprep.subr.mxu0 0.0
    %1355 = vmatpush1.msra.mxu0 0.0
    %1356 = vmatprep.subr.mxu0 0.0
    %1357 = vmatpush1.msra.mxu0 0.0
    %1358 = vmatprep.subr.mxu0 0.0
    %1359 = vmatpush1.msra.mxu0 0.0
    %1360 = vmatprep.subr.mxu0 0.0
    %1361 = vmatpush1.msra.mxu0 0.0
    %1362 = vmatprep.subr.mxu0 0.0
    %1363 = vmatpush1.msra.mxu0 0.0
    %1364 = vmatprep.subr.mxu0 0.0
    %1365 = vmatpush1.msra.mxu0 0.0
    %1366 = vmatprep.subr.mxu0 0.0
    %1367 = vmatpush1.msra.mxu0 0.0
    %1368 = vmatprep.mubr.f32.mxu0 0.0
    %1369 = vmatmul.mubr.f32.gmra.mrb[0].mxu0 %v534
    %v1370 = vpop.f32.mrb[0].mxu0
    %v1371 = vadd.f32 0.0, %v1370
    %v1372 = vpop.f32.mrb[0].mxu0
    %1373 = vmatprep.mubr.f32.mxu0 0.0
    %1374 = vmatmul.mubr.f32.gmra.mrb[0].mxu0 %v537
    %v1375 = vpop.f32.mrb[0].mxu0
    %v1376 = vadd.f32 0.0, %v1375
    %v1377 = vpop.f32.mrb[0].mxu0
    %1378 = vmatprep.mubr.f32.mxu0 0.0
    %1379 = vmatmul.mubr.f32.gmra.mrb[0].mxu0 %v540
    %v1380 = vpop.f32.mrb[0].mxu0
    %v1381 = vadd.f32 0.0, %v1380
    %v1382 = vpop.f32.mrb[0].mxu0
    %1383 = vmatprep.mubr.f32.mxu0 0.0
    %1384 = vmatmul.mubr.f32.gmra.mrb[0].mxu0 %v543
    %v1385 = vpop.f32.mrb[0].mxu0
    %v1386 = vadd.f32 0.0, %v1385
    %v1387 = vpop.f32.mrb[0].mxu0
    %1388 = vdwg.mxu0
    %s1389 = scalar_lea.vmem [#allocation8], 256
    %v1390 = vld [vmem:[%s1389] sm:$0xff]
    %v1391 = vld [vmem:[%s1389 + $0x8] sm:$0xff]
    %v1392 = vld [vmem:[%s1389 + $0x10] sm:$0xff]
    %v1393 = vld [vmem:[%s1389 + $0x18] sm:$0xff]
    %v1394 = vld [vmem:[%s1389 + $0x20] sm:$0xff]
    %v1395 = vld [vmem:[%s1389 + $0x28] sm:$0xff]
    %v1396 = vld [vmem:[%s1389 + $0x30] sm:$0xff]
    %v1397 = vld [vmem:[%s1389 + $0x38] sm:$0xff]
    %v1398 = vld [vmem:[%s1389 + $0x40] sm:$0xff]
    %v1399 = vld [vmem:[%s1389 + $0x48] sm:$0xff]
    %v1400 = vld [vmem:[%s1389 + $0x50] sm:$0xff]
    %v1401 = vld [vmem:[%s1389 + $0x58] sm:$0xff]
    %v1402 = vld [vmem:[%s1389 + $0x60] sm:$0xff]
    %v1403 = vld [vmem:[%s1389 + $0x68] sm:$0xff]
    %v1404 = vld [vmem:[%s1389 + $0x70] sm:$0xff]
    %v1405 = vld [vmem:[%s1389 + $0x78] sm:$0xff]
    %1406 = vmatprep.subr.mxu0 0.0
    %1407 = vmatpush1.msra.mxu0 %v1390
    %1408 = vmatprep.subr.mxu0 0.0
    %1409 = vmatpush1.msra.mxu0 %v1391
    %1410 = vmatprep.subr.mxu0 0.0
    %1411 = vmatpush1.msra.mxu0 %v1392
    %1412 = vmatprep.subr.mxu0 0.0
    %1413 = vmatpush1.msra.mxu0 %v1393
    %1414 = vmatprep.subr.mxu0 0.0
    %1415 = vmatpush1.msra.mxu0 %v1394
    %1416 = vmatprep.subr.mxu0 0.0
    %1417 = vmatpush1.msra.mxu0 %v1395
    %1418 = vmatprep.subr.mxu0 0.0
    %1419 = vmatpush1.msra.mxu0 %v1396
    %1420 = vmatprep.subr.mxu0 0.0
    %1421 = vmatpush1.msra.mxu0 %v1397
    %1422 = vmatprep.subr.mxu0 0.0
    %1423 = vmatpush1.msra.mxu0 %v1398
    %1424 = vmatprep.subr.mxu0 0.0
    %1425 = vmatpush1.msra.mxu0 %v1399
    %1426 = vmatprep.subr.mxu0 0.0
    %1427 = vmatpush1.msra.mxu0 %v1400
    %1428 = vmatprep.subr.mxu0 0.0
    %1429 = vmatpush1.msra.mxu0 %v1401
    %1430 = vmatprep.subr.mxu0 0.0
    %1431 = vmatpush1.msra.mxu0 %v1402
    %1432 = vmatprep.subr.mxu0 0.0
    %1433 = vmatpush1.msra.mxu0 %v1403
    %1434 = vmatprep.subr.mxu0 0.0
    %1435 = vmatpush1.msra.mxu0 %v1404
    %1436 = vmatprep.subr.mxu0 0.0
    %1437 = vmatpush1.msra.mxu0 %v1405
    %1438 = vmatprep.subr.mxu0 0.0
    %1439 = vmatpush1.msra.mxu0 0.0
    %1440 = vmatprep.subr.mxu0 0.0
    %1441 = vmatpush1.msra.mxu0 0.0
    %1442 = vmatprep.subr.mxu0 0.0
    %1443 = vmatpush1.msra.mxu0 0.0
    %1444 = vmatprep.subr.mxu0 0.0
    %1445 = vmatpush1.msra.mxu0 0.0
    %1446 = vmatprep.subr.mxu0 0.0
    %1447 = vmatpush1.msra.mxu0 0.0
    %1448 = vmatprep.subr.mxu0 0.0
    %1449 = vmatpush1.msra.mxu0 0.0
    %1450 = vmatprep.subr.mxu0 0.0
    %1451 = vmatpush1.msra.mxu0 0.0
    %1452 = vmatprep.subr.mxu0 0.0
    %1453 = vmatpush1.msra.mxu0 0.0
    %1454 = vmatprep.subr.mxu0 0.0
    %1455 = vmatpush1.msra.mxu0 0.0
    %1456 = vmatprep.subr.mxu0 0.0
    %1457 = vmatpush1.msra.mxu0 0.0
    %1458 = vmatprep.subr.mxu0 0.0
    %1459 = vmatpush1.msra.mxu0 0.0
    %1460 = vmatprep.subr.mxu0 0.0
    %1461 = vmatpush1.msra.mxu0 0.0
    %1462 = vmatprep.subr.mxu0 0.0
    %1463 = vmatpush1.msra.mxu0 0.0
    %1464 = vmatprep.subr.mxu0 0.0
    %1465 = vmatpush1.msra.mxu0 0.0
    %1466 = vmatprep.subr.mxu0 0.0
    %1467 = vmatpush1.msra.mxu0 0.0
    %1468 = vmatprep.subr.mxu0 0.0
    %1469 = vmatpush1.msra.mxu0 0.0
    %1470 = vmatprep.mubr.f32.mxu0 0.0
    %1471 = vmatmul.mubr.f32.gmra.mrb[0].mxu0 %v1371
    %v1472 = vpop.f32.mrb[0].mxu0
    %v1473 = vadd.f32 0.0, %v1472
    %v1474 = vpop.f32.mrb[0].mxu0
    %1475 = vmatprep.mubr.f32.mxu0 0.0
    %1476 = vmatmul.mubr.f32.gmra.mrb[0].mxu0 %v1376
    %v1477 = vpop.f32.mrb[0].mxu0
    %v1478 = vadd.f32 0.0, %v1477
    %v1479 = vpop.f32.mrb[0].mxu0
    %1480 = vmatprep.mubr.f32.mxu0 0.0
    %1481 = vmatmul.mubr.f32.gmra.mrb[0].mxu0 %v1381
    %v1482 = vpop.f32.mrb[0].mxu0
    %v1483 = vadd.f32 0.0, %v1482
    %v1484 = vpop.f32.mrb[0].mxu0
    %1485 = vmatprep.mubr.f32.mxu0 0.0
    %1486 = vmatmul.mubr.f32.gmra.mrb[0].mxu0 %v1386
    %v1487 = vpop.f32.mrb[0].mxu0
    %v1488 = vadd.f32 0.0, %v1487
    %v1489 = vpop.f32.mrb[0].mxu0
    %1490 = vdwg.mxu0
    %v1491 = vadd.f32 %v1286, %v1473
    %v1492 = vadd.f32 %v1291, %v1478
    %v1493 = vadd.f32 %v1296, %v1483
    %v1494 = vadd.f32 %v1301, %v1488
    %v1495 = vld [vmem:[%s7] sm:$0x1]
    %v1496 = vld [vmem:[%s8] sm:$0x1]
    %v1497 = vadd.f32 %v1491, %v1492
    %v1498 = vadd.f32 %v1497, %v1493
    %v1499 = vadd.f32 %v1498, %v1494
    %v1500 = vrot.slane %v1499, 4
    %v1501 = vadd.f32 %v1499, %v1500
    %v1502 = vrot.slane %v1501, 2
    %v1503 = vadd.f32 %v1501, %v1502
    %v1504 = vrot.slane %v1503, 1
    %v1505 = vadd.f32 %v1503, %v1504
    %v1506 = vmul.f32 %v1491, %v1491
    %v1507 = vmul.f32 %v1492, %v1492
    %v1508 = vmul.f32 %v1493, %v1493
    %v1509 = vmul.f32 %v1494, %v1494
    %v1510 = vadd.f32 %v1506, %v1507
    %v1511 = vadd.f32 %v1510, %v1508
    %v1512 = vadd.f32 %v1511, %v1509
    %v1513 = vrot.slane %v1512, 4
    %v1514 = vadd.f32 %v1512, %v1513
    %v1515 = vrot.slane %v1514, 2
    %v1516 = vadd.f32 %v1514, %v1515
    %v1517 = vrot.slane %v1516, 1
    %v1518 = vadd.f32 %v1516, %v1517
    %1519 = vmatprep.subr.mxu0 0.0
    %1520 = vmatpush1.msra.mxu0 %v105
    %1521 = vmatprep.subr.mxu0 0.0
    %1522 = vmatpush1.msra.mxu0 %v106
    %1523 = vmatprep.subr.mxu0 0.0
    %1524 = vmatpush1.msra.mxu0 %v107
    %1525 = vmatprep.subr.mxu0 0.0
    %1526 = vmatpush1.msra.mxu0 %v108
    %1527 = vmatprep.subr.mxu0 0.0
    %1528 = vmatpush1.msra.mxu0 %v109
    %1529 = vmatprep.subr.mxu0 0.0
    %1530 = vmatpush1.msra.mxu0 %v110
    %1531 = vmatprep.subr.mxu0 0.0
    %1532 = vmatpush1.msra.mxu0 %v111
    %1533 = vmatprep.subr.mxu0 0.0
    %1534 = vmatpush1.msra.mxu0 %v112
    %1535 = vmatprep.subr.mxu0 0.0
    %1536 = vmatpush1.msra.mxu0 %v113
    %1537 = vmatprep.subr.mxu0 0.0
    %1538 = vmatpush1.msra.mxu0 %v114
    %1539 = vmatprep.subr.mxu0 0.0
    %1540 = vmatpush1.msra.mxu0 %v115
    %1541 = vmatprep.subr.mxu0 0.0
    %1542 = vmatpush1.msra.mxu0 %v116
    %1543 = vmatprep.subr.mxu0 0.0
    %1544 = vmatpush1.msra.mxu0 %v117
    %1545 = vmatprep.subr.mxu0 0.0
    %1546 = vmatpush1.msra.mxu0 %v118
    %1547 = vmatprep.subr.mxu0 0.0
    %1548 = vmatpush1.msra.mxu0 %v119
    %1549 = vmatprep.subr.mxu0 0.0
    %1550 = vmatpush1.msra.mxu0 %v120
    %1551 = vmatprep.subr.mxu0 0.0
    %1552 = vmatpush1.msra.mxu0 0.0
    %1553 = vmatprep.subr.mxu0 0.0
    %1554 = vmatpush1.msra.mxu0 0.0
    %1555 = vmatprep.subr.mxu0 0.0
    %1556 = vmatpush1.msra.mxu0 0.0
    %1557 = vmatprep.subr.mxu0 0.0
    %1558 = vmatpush1.msra.mxu0 0.0
    %1559 = vmatprep.subr.mxu0 0.0
    %1560 = vmatpush1.msra.mxu0 0.0
    %1561 = vmatprep.subr.mxu0 0.0
    %1562 = vmatpush1.msra.mxu0 0.0
    %1563 = vmatprep.subr.mxu0 0.0
    %1564 = vmatpush1.msra.mxu0 0.0
    %1565 = vmatprep.subr.mxu0 0.0
    %1566 = vmatpush1.msra.mxu0 0.0
    %1567 = vmatprep.subr.mxu0 0.0
    %1568 = vmatpush1.msra.mxu0 0.0
    %1569 = vmatprep.subr.mxu0 0.0
    %1570 = vmatpush1.msra.mxu0 0.0
    %1571 = vmatprep.subr.mxu0 0.0
    %1572 = vmatpush1.msra.mxu0 0.0
    %1573 = vmatprep.subr.mxu0 0.0
    %1574 = vmatpush1.msra.mxu0 0.0
    %1575 = vmatprep.subr.mxu0 0.0
    %1576 = vmatpush1.msra.mxu0 0.0
    %1577 = vmatprep.subr.mxu0 0.0
    %1578 = vmatpush1.msra.mxu0 0.0
    %1579 = vmatprep.subr.mxu0 0.0
    %1580 = vmatpush1.msra.mxu0 0.0
    %1581 = vmatprep.subr.mxu0 0.0
    %1582 = vmatpush1.msra.mxu0 0.0
    %1583 = vmatprep.mubr.f32.mxu0 0.0
    %1584 = vmatmul.mubr.f32.gmra.mrb[0].mxu0 %v1505
    %v1585 = vpop.f32.mrb[0].mxu0
    %v1586 = vadd.f32 0.0, %v1585
    %v1587 = vpop.f32.mrb[0].mxu0
    %1588 = vdwg.mxu0
    %1589 = vmatprep.subr.mxu0 0.0
    %1590 = vmatpush1.msra.mxu0 %v105
    %1591 = vmatprep.subr.mxu0 0.0
    %1592 = vmatpush1.msra.mxu0 %v106
    %1593 = vmatprep.subr.mxu0 0.0
    %1594 = vmatpush1.msra.mxu0 %v107
    %1595 = vmatprep.subr.mxu0 0.0
    %1596 = vmatpush1.msra.mxu0 %v108
    %1597 = vmatprep.subr.mxu0 0.0
    %1598 = vmatpush1.msra.mxu0 %v109
    %1599 = vmatprep.subr.mxu0 0.0
    %1600 = vmatpush1.msra.mxu0 %v110
    %1601 = vmatprep.subr.mxu0 0.0
    %1602 = vmatpush1.msra.mxu0 %v111
    %1603 = vmatprep.subr.mxu0 0.0
    %1604 = vmatpush1.msra.mxu0 %v112
    %1605 = vmatprep.subr.mxu0 0.0
    %1606 = vmatpush1.msra.mxu0 %v113
    %1607 = vmatprep.subr.mxu0 0.0
    %1608 = vmatpush1.msra.mxu0 %v114
    %1609 = vmatprep.subr.mxu0 0.0
    %1610 = vmatpush1.msra.mxu0 %v115
    %1611 = vmatprep.subr.mxu0 0.0
    %1612 = vmatpush1.msra.mxu0 %v116
    %1613 = vmatprep.subr.mxu0 0.0
    %1614 = vmatpush1.msra.mxu0 %v117
    %1615 = vmatprep.subr.mxu0 0.0
    %1616 = vmatpush1.msra.mxu0 %v118
    %1617 = vmatprep.subr.mxu0 0.0
    %1618 = vmatpush1.msra.mxu0 %v119
    %1619 = vmatprep.subr.mxu0 0.0
    %1620 = vmatpush1.msra.mxu0 %v120
    %1621 = vmatprep.subr.mxu0 0.0
    %1622 = vmatpush1.msra.mxu0 0.0
    %1623 = vmatprep.subr.mxu0 0.0
    %1624 = vmatpush1.msra.mxu0 0.0
    %1625 = vmatprep.subr.mxu0 0.0
    %1626 = vmatpush1.msra.mxu0 0.0
    %1627 = vmatprep.subr.mxu0 0.0
    %1628 = vmatpush1.msra.mxu0 0.0
    %1629 = vmatprep.subr.mxu0 0.0
    %1630 = vmatpush1.msra.mxu0 0.0
    %1631 = vmatprep.subr.mxu0 0.0
    %1632 = vmatpush1.msra.mxu0 0.0
    %1633 = vmatprep.subr.mxu0 0.0
    %1634 = vmatpush1.msra.mxu0 0.0
    %1635 = vmatprep.subr.mxu0 0.0
    %1636 = vmatpush1.msra.mxu0 0.0
    %1637 = vmatprep.subr.mxu0 0.0
    %1638 = vmatpush1.msra.mxu0 0.0
    %1639 = vmatprep.subr.mxu0 0.0
    %1640 = vmatpush1.msra.mxu0 0.0
    %1641 = vmatprep.subr.mxu0 0.0
    %1642 = vmatpush1.msra.mxu0 0.0
    %1643 = vmatprep.subr.mxu0 0.0
    %1644 = vmatpush1.msra.mxu0 0.0
    %1645 = vmatprep.subr.mxu0 0.0
    %1646 = vmatpush1.msra.mxu0 0.0
    %1647 = vmatprep.subr.mxu0 0.0
    %1648 = vmatpush1.msra.mxu0 0.0
    %1649 = vmatprep.subr.mxu0 0.0
    %1650 = vmatpush1.msra.mxu0 0.0
    %1651 = vmatprep.subr.mxu0 0.0
    %1652 = vmatpush1.msra.mxu0 0.0
    %1653 = vmatprep.mubr.f32.mxu0 0.0
    %1654 = vmatmul.mubr.f32.gmra.mrb[0].mxu0 %v1518
    %v1655 = vpop.f32.mrb[0].mxu0
    %v1656 = vadd.f32 0.0, %v1655
    %v1657 = vpop.f32.mrb[0].mxu0
    %1658 = vdwg.mxu0
    %v1659 = vmul.f32 %v1586, %v1586
    %v1660 = vsub.f32 %v1656, %v1659
    %v1661 = vadd.f32 %v1660, 1e-05
    %v1662 = vrsqrt.pop %v1661
    %v1663 = vmul.f32 %v1495, %v1662
    %v1665 = vlaneseq
    %v1666 = vshrl.u32 %v1665, 7
    %v1667 = vsub.s32 0, %v1666
    %v1668 = vrot.slane %v1663, %v1667
    %v1670 = vmul.f32 %v1491, %v1668
    %v1671 = vmul.f32 %v1492, %v1668
    %v1672 = vmul.f32 %v1493, %v1668
    %v1673 = vmul.f32 %v1494, %v1668
    %v1674 = vmul.f32 %v1586, %v1663
    %v1675 = vsub.f32 %v1496, %v1674
    %v1677 = vlaneseq
    %v1678 = vshrl.u32 %v1677, 7
    %v1679 = vsub.s32 0, %v1678
    %v1680 = vrot.slane %v1675, %v1679
    %v1682 = vadd.f32 %v1670, %v1680
    %v1683 = vadd.f32 %v1671, %v1680
    %v1684 = vadd.f32 %v1672, %v1680
    %v1685 = vadd.f32 %v1673, %v1680
    %v1686 = vadd.f32 %v1682, %v101
    %v1687 = vadd.f32 %v1683, %v102
    %v1688 = vadd.f32 %v1684, %v103
    %v1689 = vadd.f32 %v1685, %v104
    %v1690 = vmax.f32 %v1686, 0.0
    %v1691 = vmax.f32 %v1687, 0.0
    %v1692 = vmax.f32 %v1688, 0.0
    %v1693 = vmax.f32 %v1689, 0.0
    %1694 = vst [vmem:[#allocation11] sm:$0xff] %v1690
    %1695 = vst [vmem:[#allocation11 + $0x8] sm:$0xff] %v1691
    %1696 = vst [vmem:[#allocation11 + $0x10] sm:$0xff] %v1692
    %1697 = vst [vmem:[#allocation11 + $0x18] sm:$0xff] %v1693
    // Predicated region
    $region58: #{tpu_custom_call.1} parent=1 // pred_check
      _
    $region59: #{tpu_custom_call.1} parent=1 // pred_check_branch
      %1699 = sbr.rel (0) target = $region61
    $region60: #{tpu_custom_call.1} parent=1 // pred_region
      %s1701 = ssub.s32 512, 512
      %1702 = vsyncadd [#allocation4], %s1701
      %s1703 = sshll.u32 [#allocation11], 4
      %s1704 = int_to_ptr.vmem [resolvable:$true] %s1703
      %1709 = dma.vmem_to_hbm [thread:$0]  %s1704, 512, %s9, [#allocation4], 128, 128, 8
    $region61: #{tpu_custom_call.1} parent=1 // pred_fallthru
      _
    // Predicated region
    $region62: #{tpu_custom_call.1} parent=1 // pred_check
      _
    $region63: #{tpu_custom_call.1} parent=1 // pred_check_branch
      %1711 = sbr.rel (0) target = $region65
    $region64: #{tpu_custom_call.1} parent=1 // pred_region
      %1712 = dma.done [#allocation4], 512
    $region65: #{tpu_custom_call.1} parent=1 // pred_fallthru
      _
    %1713 = vsyncpa [#allocation3], 1
    %1714 = vsyncpa [#allocation6], 1
    %1715 = vsyncpa [#allocation9], 1
    %1716 = vsyncpa [#allocation4], 1

</llo_original>
